<compile_context>
chip_gen: v6e
topology: v6e:2x2x1
jax: 0.10.0
libtpu: 0.0.40
codegen_flags: <defaults>
</compile_context>

<pallas_src>
import jax
import jax.numpy as jnp
from jax import lax
from jax.experimental import pallas as pl
from jax.experimental.pallas import tpu as pltpu


def _dti_kernel(w_smem, op_smem, mem_ref, rootf_ref, wstack_ref, role_ref,
                o_ref, arg_scr):
    # w_smem:    (B, L*4)  SMEM  arg_weights flattened, scalar-prefetched
    # op_smem:   (B, 3)    SMEM  op_dist, scalar-prefetched
    # mem_ref:   (Bb, L, F, R)   memory block (natural PyTorch layout)
    # rootf_ref: (Bb, F, 1)      root_filler
    # wstack_ref:(4R, R)         [D_l^T; D_r^T; E_l^T; E_r^T] stacked (wrapper, once)
    # role_ref:  (1, R)          root_role
    # o_ref:     (Bb, F, R)      output block
    # arg_scr:   (Bb*F, 4R) f32  VMEM scratch holding the 4 weighted sums
    Bb, L, F, R = mem_ref.shape
    base = pl.program_id(0) * Bb          # first batch row of this block

    # ---- Stage 1: weighted sums over L for all four predefined ops ----------
    # The per-(b,l) coefficients are SMEM scalars splatted onto (F, R) tiles by
    # the VPU; op_dist is folded in here.  Accumulate in f32.
    # TODO(synk): switch the static b/l loops to lax.fori_loop if B_blk*L gets large.
    for b in range(Bb):
        op_car = op_smem[base + b, 0]
        op_cdr = op_smem[base + b, 1]
        op_cons = op_smem[base + b, 2]
        coeff = (op_car, op_cdr, op_cons, op_cons)
        accs = [jnp.zeros((F, R), jnp.float32) for _ in range(4)]
        for l in range(L):
            tile = mem_ref[b, l].astype(jnp.float32)          # (F, R)
            for k in range(4):
                s = w_smem[base + b, l * 4 + k] * coeff[k]    # scalar
                accs[k] = accs[k] + s * tile
        for k in range(4):
            arg_scr[b * F:(b + 1) * F, k * R:(k + 1) * R] = accs[k]

    # ---- Stage 2: one fused MXU matmul for the whole batch block ------------
    #   (Bb*F, 4R) @ (4R, R); weights pre-transposed/stacked once in the wrapper,
    #   so this is a plain last-dim/first-dim contraction (no in-kernel .T).
    out2d = jnp.dot(arg_scr[...], wstack_ref[...],
                    preferred_element_type=jnp.float32)       # (Bb*F, R)

    # ---- Epilogue: cons-net root term + lane-dense store ---------------------
    role = role_ref[...].astype(jnp.float32)                  # (1, R)
    for b in range(Bb):
        op_cons = op_smem[base + b, 2]
        root_b = (op_cons * rootf_ref[b].astype(jnp.float32)) * role   # (F,1)*(1,R)
        o_ref[b] = (out2d[b * F:(b + 1) * F, :] + root_b).astype(o_ref.dtype)


def _pick_batch_block(batch, per_batch_bytes, budget_bytes=4 << 20, max_unroll=8):
    # Size the batch block against a v7x-safe VMEM budget (inputs are double
    # buffered) and cap the static in-kernel unroll.
    blk = min(batch, max_unroll, max(1, budget_bytes // max(per_batch_bytes, 1)))
    while batch % blk:
        blk -= 1
    return blk


def diff_tree_interpreter_forward(memory, arg_weights, root_filler, op_dist,
                                  D_l, D_r, E_l, E_r, root_role,
                                  batch_block=None):
    B, L, F, R = memory.shape
    assert arg_weights.shape == (B, L, 4)
    assert op_dist.shape == (B, 3)
    assert root_filler.shape == (B, F)
    for W in (D_l, D_r, E_l, E_r):
        assert W.shape == (R, R)
    assert root_role.shape == (R,)

    # One-time parameter / layout plumbing (done outside the hot loop):
    #   w_stack[k*R + r, r'] = W_k[r', r]  so all four per-op projections collapse
    #   into a single (B_blk*F, 4R) @ (4R, R) matmul inside the kernel.
    w_stack = jnp.concatenate([D_l.T, D_r.T, E_l.T, E_r.T], axis=0)   # (4R, R)
    role_row = root_role.reshape(1, R)
    root_filler3 = root_filler.reshape(B, F, 1)
    w_flat = arg_weights.reshape(B, L * 4)                            # SMEM scalar table

    if batch_block is None:
        batch_block = _pick_batch_block(
            B, per_batch_bytes=L * F * R * memory.dtype.itemsize)
    Bb = batch_block
    assert B % Bb == 0

    return pl.pallas_call(
        _dti_kernel,
        out_shape=jax.ShapeDtypeStruct((B, F, R), memory.dtype),
        grid_spec=pltpu.PrefetchScalarGridSpec(
            num_scalar_prefetch=2,                 # arg_weights + op_dist -> SMEM
            grid=(B // Bb,),
            in_specs=[
                pl.BlockSpec((Bb, L, F, R), lambda i, w, op: (i, 0, 0, 0)),
                pl.BlockSpec((Bb, F, 1), lambda i, w, op: (i, 0, 0)),
                pl.BlockSpec((4 * R, R), lambda i, w, op: (0, 0)),
                pl.BlockSpec((1, R), lambda i, w, op: (0, 0)),
            ],
            out_specs=pl.BlockSpec((Bb, F, R), lambda i, w, op: (i, 0, 0)),
            scratch_shapes=[pltpu.VMEM((Bb * F, 4 * R), jnp.float32)],
        ),
        compiler_params=pltpu.CompilerParams(
            dimension_semantics=("parallel",)),     # useful on v7x's 2 TCs when grid > 1
    )(w_flat, op_dist, memory, root_filler3, w_stack, role_row)


def _reference(memory, arg_weights, root_filler, op_dist,
               D_l, D_r, E_l, E_r, root_role):
    hi = lax.Precision.HIGHEST

    def weighted(w):
        return jnp.einsum('blfr,bl->bfr', memory, w, precision=hi)

    car = jnp.einsum('bfr,tr->bft', weighted(arg_weights[:, :, 0]), D_l, precision=hi)
    cdr = jnp.einsum('bfr,tr->bft', weighted(arg_weights[:, :, 1]), D_r, precision=hi)
    cons = (jnp.einsum('bfr,tr->bft', weighted(arg_weights[:, :, 2]), E_l, precision=hi)
            + jnp.einsum('bfr,tr->bft', weighted(arg_weights[:, :, 3]), E_r, precision=hi)
            + jnp.einsum('bf,r->bfr', root_filler, root_role))
    full = jnp.stack([car, cdr, cons], axis=1)
    return jnp.einsum('bnfr,bn->bfr', full, op_dist, precision=hi)


if __name__ == "__main__":
    # Small shapes consistent with the module: memory (B, L, F, R) with
    # d_role = R (lane-dense), the D_*/E_* operators are (R, R).
    B, L, F, R = 4, 8, 8, 128

    key = jax.random.PRNGKey(0)
    keys = jax.random.split(key, 9)
    memory = jax.random.normal(keys[0], (B, L, F, R), dtype=jnp.float32)
    arg_weights = jax.random.normal(keys[1], (B, L, 4), dtype=jnp.float32)
    root_filler = jax.random.normal(keys[2], (B, F), dtype=jnp.float32)
    op_dist = jax.nn.softmax(jax.random.normal(keys[3], (B, 3), dtype=jnp.float32), axis=-1)
    D_l = jax.random.normal(keys[4], (R, R), dtype=jnp.float32) / jnp.sqrt(R)
    D_r = jax.random.normal(keys[5], (R, R), dtype=jnp.float32) / jnp.sqrt(R)
    E_l = jax.random.normal(keys[6], (R, R), dtype=jnp.float32) / jnp.sqrt(R)
    E_r = jax.random.normal(keys[7], (R, R), dtype=jnp.float32) / jnp.sqrt(R)
    root_role = jax.random.normal(keys[8], (R,), dtype=jnp.float32)

    out = diff_tree_interpreter_forward(memory, arg_weights, root_filler, op_dist,
                                        D_l, D_r, E_l, E_r, root_role)
    out = jax.block_until_ready(out)

    ref = _reference(memory, arg_weights, root_filler, op_dist,
                     D_l, D_r, E_l, E_r, root_role)
    assert out.shape == (B, F, R)
    assert jnp.allclose(out, ref, rtol=1e-2, atol=1e-2), float(jnp.max(jnp.abs(out - ref)))
    print("KERNEL_OK")
</pallas_src>

<mosaic_0001>
module attributes {stable_mosaic.version = 11 : i64} {
  func.func @_dti_kernel(%arg0: i32, %arg1: memref<4x32xf32, #tpu.memory_space<smem>>, %arg2: memref<4x3xf32, #tpu.memory_space<smem>>, %arg3: memref<4x8x8x128xf32, #tpu.memory_space<vmem>>, %arg4: memref<4x8x1xf32, #tpu.memory_space<vmem>>, %arg5: memref<512x128xf32, #tpu.memory_space<vmem>>, %arg6: memref<1x128xf32, #tpu.memory_space<vmem>>, %arg7: memref<4x8x128xf32, #tpu.memory_space<vmem>>, %arg8: memref<32x512xf32, #tpu.memory_space<vmem>>) attributes {dimension_semantics = [#tpu.dimension_semantics<parallel>], iteration_bounds = array<i64: 1>, scalar_prefetch = 2 : i64, scratch_operands = 1 : i64, tpu.core_type = #tpu.core_type<tc>, window_params = [{transform_indices = @transform_0, window_bounds = array<i64: 4, 8, 8, 128>}, {transform_indices = @transform_1, window_bounds = array<i64: 4, 8, 1>}, {pipeline_mode = #tpu.pipeline_mode<synchronous>, transform_indices = @transform_2, window_bounds = array<i64: 512, 128>}, {pipeline_mode = #tpu.pipeline_mode<synchronous>, transform_indices = @transform_3, window_bounds = array<i64: 1, 128>}, {transform_indices = @transform_4, window_bounds = array<i64: 4, 8, 128>}]} {
    %c4_i32 = arith.constant 4 : i32
    %0 = arith.muli %arg0, %c4_i32 : i32
    %c0_i32 = arith.constant 0 : i32
    %1 = arith.addi %0, %c0_i32 : i32
    %2 = arith.index_cast %1 : i32 to index
    %c0 = arith.constant 0 : index
    %3 = memref.load %arg2[%2, %c0] : memref<4x3xf32, #tpu.memory_space<smem>>
    %c0_i32_0 = arith.constant 0 : i32
    %4 = arith.addi %0, %c0_i32_0 : i32
    %5 = arith.index_cast %4 : i32 to index
    %c1 = arith.constant 1 : index
    %6 = memref.load %arg2[%5, %c1] : memref<4x3xf32, #tpu.memory_space<smem>>
    %c0_i32_1 = arith.constant 0 : i32
    %7 = arith.addi %0, %c0_i32_1 : i32
    %8 = arith.index_cast %7 : i32 to index
    %c2 = arith.constant 2 : index
    %9 = memref.load %arg2[%8, %c2] : memref<4x3xf32, #tpu.memory_space<smem>>
    %cst = arith.constant 0.000000e+00 : f32
    %10 = vector.broadcast %cst : f32 to vector<8x128xf32>
    %cst_2 = arith.constant 0.000000e+00 : f32
    %11 = vector.broadcast %cst_2 : f32 to vector<8x128xf32>
    %cst_3 = arith.constant 0.000000e+00 : f32
    %12 = vector.broadcast %cst_3 : f32 to vector<8x128xf32>
    %cst_4 = arith.constant 0.000000e+00 : f32
    %13 = vector.broadcast %cst_4 : f32 to vector<8x128xf32>
    %c0_5 = arith.constant 0 : index
    %c0_6 = arith.constant 0 : index
    %c0_7 = arith.constant 0 : index
    %c0_8 = arith.constant 0 : index
    %14 = vector.load %arg3[%c0_5, %c0_6, %c0_7, %c0_8] : memref<4x8x8x128xf32, #tpu.memory_space<vmem>>, vector<1x1x8x128xf32>
    %15 = vector.shape_cast %14 : vector<1x1x8x128xf32> to vector<8x128xf32>
    %c0_i32_9 = arith.constant 0 : i32
    %16 = arith.addi %0, %c0_i32_9 : i32
    %17 = arith.index_cast %16 : i32 to index
    %c0_10 = arith.constant 0 : index
    %18 = memref.load %arg1[%17, %c0_10] : memref<4x32xf32, #tpu.memory_space<smem>>
    %19 = arith.mulf %18, %3 : f32
    %20 = vector.broadcast %19 : f32 to vector<8x128xf32>
    %21 = arith.mulf %20, %15 : vector<8x128xf32>
    %22 = arith.addf %10, %21 : vector<8x128xf32>
    %c0_i32_11 = arith.constant 0 : i32
    %23 = arith.addi %0, %c0_i32_11 : i32
    %24 = arith.index_cast %23 : i32 to index
    %c1_12 = arith.constant 1 : index
    %25 = memref.load %arg1[%24, %c1_12] : memref<4x32xf32, #tpu.memory_space<smem>>
    %26 = arith.mulf %25, %6 : f32
    %27 = vector.broadcast %26 : f32 to vector<8x128xf32>
    %28 = arith.mulf %27, %15 : vector<8x128xf32>
    %29 = arith.addf %11, %28 : vector<8x128xf32>
    %c0_i32_13 = arith.constant 0 : i32
    %30 = arith.addi %0, %c0_i32_13 : i32
    %31 = arith.index_cast %30 : i32 to index
    %c2_14 = arith.constant 2 : index
    %32 = memref.load %arg1[%31, %c2_14] : memref<4x32xf32, #tpu.memory_space<smem>>
    %33 = arith.mulf %32, %9 : f32
    %34 = vector.broadcast %33 : f32 to vector<8x128xf32>
    %35 = arith.mulf %34, %15 : vector<8x128xf32>
    %36 = arith.addf %12, %35 : vector<8x128xf32>
    %c0_i32_15 = arith.constant 0 : i32
    %37 = arith.addi %0, %c0_i32_15 : i32
    %38 = arith.index_cast %37 : i32 to index
    %c3 = arith.constant 3 : index
    %39 = memref.load %arg1[%38, %c3] : memref<4x32xf32, #tpu.memory_space<smem>>
    %40 = arith.mulf %39, %9 : f32
    %41 = vector.broadcast %40 : f32 to vector<8x128xf32>
    %42 = arith.mulf %41, %15 : vector<8x128xf32>
    %43 = arith.addf %13, %42 : vector<8x128xf32>
    %c0_16 = arith.constant 0 : index
    %c1_17 = arith.constant 1 : index
    %c0_18 = arith.constant 0 : index
    %c0_19 = arith.constant 0 : index
    %44 = vector.load %arg3[%c0_16, %c1_17, %c0_18, %c0_19] : memref<4x8x8x128xf32, #tpu.memory_space<vmem>>, vector<1x1x8x128xf32>
    %45 = vector.shape_cast %44 : vector<1x1x8x128xf32> to vector<8x128xf32>
    %c0_i32_20 = arith.constant 0 : i32
    %46 = arith.addi %0, %c0_i32_20 : i32
    %47 = arith.index_cast %46 : i32 to index
    %c4 = arith.constant 4 : index
    %48 = memref.load %arg1[%47, %c4] : memref<4x32xf32, #tpu.memory_space<smem>>
    %49 = arith.mulf %48, %3 : f32
    %50 = vector.broadcast %49 : f32 to vector<8x128xf32>
    %51 = arith.mulf %50, %45 : vector<8x128xf32>
    %52 = arith.addf %22, %51 : vector<8x128xf32>
    %c0_i32_21 = arith.constant 0 : i32
    %53 = arith.addi %0, %c0_i32_21 : i32
    %54 = arith.index_cast %53 : i32 to index
    %c5 = arith.constant 5 : index
    %55 = memref.load %arg1[%54, %c5] : memref<4x32xf32, #tpu.memory_space<smem>>
    %56 = arith.mulf %55, %6 : f32
    %57 = vector.broadcast %56 : f32 to vector<8x128xf32>
    %58 = arith.mulf %57, %45 : vector<8x128xf32>
    %59 = arith.addf %29, %58 : vector<8x128xf32>
    %c0_i32_22 = arith.constant 0 : i32
    %60 = arith.addi %0, %c0_i32_22 : i32
    %61 = arith.index_cast %60 : i32 to index
    %c6 = arith.constant 6 : index
    %62 = memref.load %arg1[%61, %c6] : memref<4x32xf32, #tpu.memory_space<smem>>
    %63 = arith.mulf %62, %9 : f32
    %64 = vector.broadcast %63 : f32 to vector<8x128xf32>
    %65 = arith.mulf %64, %45 : vector<8x128xf32>
    %66 = arith.addf %36, %65 : vector<8x128xf32>
    %c0_i32_23 = arith.constant 0 : i32
    %67 = arith.addi %0, %c0_i32_23 : i32
    %68 = arith.index_cast %67 : i32 to index
    %c7 = arith.constant 7 : index
    %69 = memref.load %arg1[%68, %c7] : memref<4x32xf32, #tpu.memory_space<smem>>
    %70 = arith.mulf %69, %9 : f32
    %71 = vector.broadcast %70 : f32 to vector<8x128xf32>
    %72 = arith.mulf %71, %45 : vector<8x128xf32>
    %73 = arith.addf %43, %72 : vector<8x128xf32>
    %c0_24 = arith.constant 0 : index
    %c2_25 = arith.constant 2 : index
    %c0_26 = arith.constant 0 : index
    %c0_27 = arith.constant 0 : index
    %74 = vector.load %arg3[%c0_24, %c2_25, %c0_26, %c0_27] : memref<4x8x8x128xf32, #tpu.memory_space<vmem>>, vector<1x1x8x128xf32>
    %75 = vector.shape_cast %74 : vector<1x1x8x128xf32> to vector<8x128xf32>
    %c0_i32_28 = arith.constant 0 : i32
    %76 = arith.addi %0, %c0_i32_28 : i32
    %77 = arith.index_cast %76 : i32 to index
    %c8 = arith.constant 8 : index
    %78 = memref.load %arg1[%77, %c8] : memref<4x32xf32, #tpu.memory_space<smem>>
    %79 = arith.mulf %78, %3 : f32
    %80 = vector.broadcast %79 : f32 to vector<8x128xf32>
    %81 = arith.mulf %80, %75 : vector<8x128xf32>
    %82 = arith.addf %52, %81 : vector<8x128xf32>
    %c0_i32_29 = arith.constant 0 : i32
    %83 = arith.addi %0, %c0_i32_29 : i32
    %84 = arith.index_cast %83 : i32 to index
    %c9 = arith.constant 9 : index
    %85 = memref.load %arg1[%84, %c9] : memref<4x32xf32, #tpu.memory_space<smem>>
    %86 = arith.mulf %85, %6 : f32
    %87 = vector.broadcast %86 : f32 to vector<8x128xf32>
    %88 = arith.mulf %87, %75 : vector<8x128xf32>
    %89 = arith.addf %59, %88 : vector<8x128xf32>
    %c0_i32_30 = arith.constant 0 : i32
    %90 = arith.addi %0, %c0_i32_30 : i32
    %91 = arith.index_cast %90 : i32 to index
    %c10 = arith.constant 10 : index
    %92 = memref.load %arg1[%91, %c10] : memref<4x32xf32, #tpu.memory_space<smem>>
    %93 = arith.mulf %92, %9 : f32
    %94 = vector.broadcast %93 : f32 to vector<8x128xf32>
    %95 = arith.mulf %94, %75 : vector<8x128xf32>
    %96 = arith.addf %66, %95 : vector<8x128xf32>
    %c0_i32_31 = arith.constant 0 : i32
    %97 = arith.addi %0, %c0_i32_31 : i32
    %98 = arith.index_cast %97 : i32 to index
    %c11 = arith.constant 11 : index
    %99 = memref.load %arg1[%98, %c11] : memref<4x32xf32, #tpu.memory_space<smem>>
    %100 = arith.mulf %99, %9 : f32
    %101 = vector.broadcast %100 : f32 to vector<8x128xf32>
    %102 = arith.mulf %101, %75 : vector<8x128xf32>
    %103 = arith.addf %73, %102 : vector<8x128xf32>
    %c0_32 = arith.constant 0 : index
    %c3_33 = arith.constant 3 : index
    %c0_34 = arith.constant 0 : index
    %c0_35 = arith.constant 0 : index
    %104 = vector.load %arg3[%c0_32, %c3_33, %c0_34, %c0_35] : memref<4x8x8x128xf32, #tpu.memory_space<vmem>>, vector<1x1x8x128xf32>
    %105 = vector.shape_cast %104 : vector<1x1x8x128xf32> to vector<8x128xf32>
    %c0_i32_36 = arith.constant 0 : i32
    %106 = arith.addi %0, %c0_i32_36 : i32
    %107 = arith.index_cast %106 : i32 to index
    %c12 = arith.constant 12 : index
    %108 = memref.load %arg1[%107, %c12] : memref<4x32xf32, #tpu.memory_space<smem>>
    %109 = arith.mulf %108, %3 : f32
    %110 = vector.broadcast %109 : f32 to vector<8x128xf32>
    %111 = arith.mulf %110, %105 : vector<8x128xf32>
    %112 = arith.addf %82, %111 : vector<8x128xf32>
    %c0_i32_37 = arith.constant 0 : i32
    %113 = arith.addi %0, %c0_i32_37 : i32
    %114 = arith.index_cast %113 : i32 to index
    %c13 = arith.constant 13 : index
    %115 = memref.load %arg1[%114, %c13] : memref<4x32xf32, #tpu.memory_space<smem>>
    %116 = arith.mulf %115, %6 : f32
    %117 = vector.broadcast %116 : f32 to vector<8x128xf32>
    %118 = arith.mulf %117, %105 : vector<8x128xf32>
    %119 = arith.addf %89, %118 : vector<8x128xf32>
    %c0_i32_38 = arith.constant 0 : i32
    %120 = arith.addi %0, %c0_i32_38 : i32
    %121 = arith.index_cast %120 : i32 to index
    %c14 = arith.constant 14 : index
    %122 = memref.load %arg1[%121, %c14] : memref<4x32xf32, #tpu.memory_space<smem>>
    %123 = arith.mulf %122, %9 : f32
    %124 = vector.broadcast %123 : f32 to vector<8x128xf32>
    %125 = arith.mulf %124, %105 : vector<8x128xf32>
    %126 = arith.addf %96, %125 : vector<8x128xf32>
    %c0_i32_39 = arith.constant 0 : i32
    %127 = arith.addi %0, %c0_i32_39 : i32
    %128 = arith.index_cast %127 : i32 to index
    %c15 = arith.constant 15 : index
    %129 = memref.load %arg1[%128, %c15] : memref<4x32xf32, #tpu.memory_space<smem>>
    %130 = arith.mulf %129, %9 : f32
    %131 = vector.broadcast %130 : f32 to vector<8x128xf32>
    %132 = arith.mulf %131, %105 : vector<8x128xf32>
    %133 = arith.addf %103, %132 : vector<8x128xf32>
    %c0_40 = arith.constant 0 : index
    %c4_41 = arith.constant 4 : index
    %c0_42 = arith.constant 0 : index
    %c0_43 = arith.constant 0 : index
    %134 = vector.load %arg3[%c0_40, %c4_41, %c0_42, %c0_43] : memref<4x8x8x128xf32, #tpu.memory_space<vmem>>, vector<1x1x8x128xf32>
    %135 = vector.shape_cast %134 : vector<1x1x8x128xf32> to vector<8x128xf32>
    %c0_i32_44 = arith.constant 0 : i32
    %136 = arith.addi %0, %c0_i32_44 : i32
    %137 = arith.index_cast %136 : i32 to index
    %c16 = arith.constant 16 : index
    %138 = memref.load %arg1[%137, %c16] : memref<4x32xf32, #tpu.memory_space<smem>>
    %139 = arith.mulf %138, %3 : f32
    %140 = vector.broadcast %139 : f32 to vector<8x128xf32>
    %141 = arith.mulf %140, %135 : vector<8x128xf32>
    %142 = arith.addf %112, %141 : vector<8x128xf32>
    %c0_i32_45 = arith.constant 0 : i32
    %143 = arith.addi %0, %c0_i32_45 : i32
    %144 = arith.index_cast %143 : i32 to index
    %c17 = arith.constant 17 : index
    %145 = memref.load %arg1[%144, %c17] : memref<4x32xf32, #tpu.memory_space<smem>>
    %146 = arith.mulf %145, %6 : f32
    %147 = vector.broadcast %146 : f32 to vector<8x128xf32>
    %148 = arith.mulf %147, %135 : vector<8x128xf32>
    %149 = arith.addf %119, %148 : vector<8x128xf32>
    %c0_i32_46 = arith.constant 0 : i32
    %150 = arith.addi %0, %c0_i32_46 : i32
    %151 = arith.index_cast %150 : i32 to index
    %c18 = arith.constant 18 : index
    %152 = memref.load %arg1[%151, %c18] : memref<4x32xf32, #tpu.memory_space<smem>>
    %153 = arith.mulf %152, %9 : f32
    %154 = vector.broadcast %153 : f32 to vector<8x128xf32>
    %155 = arith.mulf %154, %135 : vector<8x128xf32>
    %156 = arith.addf %126, %155 : vector<8x128xf32>
    %c0_i32_47 = arith.constant 0 : i32
    %157 = arith.addi %0, %c0_i32_47 : i32
    %158 = arith.index_cast %157 : i32 to index
    %c19 = arith.constant 19 : index
    %159 = memref.load %arg1[%158, %c19] : memref<4x32xf32, #tpu.memory_space<smem>>
    %160 = arith.mulf %159, %9 : f32
    %161 = vector.broadcast %160 : f32 to vector<8x128xf32>
    %162 = arith.mulf %161, %135 : vector<8x128xf32>
    %163 = arith.addf %133, %162 : vector<8x128xf32>
    %c0_48 = arith.constant 0 : index
    %c5_49 = arith.constant 5 : index
    %c0_50 = arith.constant 0 : index
    %c0_51 = arith.constant 0 : index
    %164 = vector.load %arg3[%c0_48, %c5_49, %c0_50, %c0_51] : memref<4x8x8x128xf32, #tpu.memory_space<vmem>>, vector<1x1x8x128xf32>
    %165 = vector.shape_cast %164 : vector<1x1x8x128xf32> to vector<8x128xf32>
    %c0_i32_52 = arith.constant 0 : i32
    %166 = arith.addi %0, %c0_i32_52 : i32
    %167 = arith.index_cast %166 : i32 to index
    %c20 = arith.constant 20 : index
    %168 = memref.load %arg1[%167, %c20] : memref<4x32xf32, #tpu.memory_space<smem>>
    %169 = arith.mulf %168, %3 : f32
    %170 = vector.broadcast %169 : f32 to vector<8x128xf32>
    %171 = arith.mulf %170, %165 : vector<8x128xf32>
    %172 = arith.addf %142, %171 : vector<8x128xf32>
    %c0_i32_53 = arith.constant 0 : i32
    %173 = arith.addi %0, %c0_i32_53 : i32
    %174 = arith.index_cast %173 : i32 to index
    %c21 = arith.constant 21 : index
    %175 = memref.load %arg1[%174, %c21] : memref<4x32xf32, #tpu.memory_space<smem>>
    %176 = arith.mulf %175, %6 : f32
    %177 = vector.broadcast %176 : f32 to vector<8x128xf32>
    %178 = arith.mulf %177, %165 : vector<8x128xf32>
    %179 = arith.addf %149, %178 : vector<8x128xf32>
    %c0_i32_54 = arith.constant 0 : i32
    %180 = arith.addi %0, %c0_i32_54 : i32
    %181 = arith.index_cast %180 : i32 to index
    %c22 = arith.constant 22 : index
    %182 = memref.load %arg1[%181, %c22] : memref<4x32xf32, #tpu.memory_space<smem>>
    %183 = arith.mulf %182, %9 : f32
    %184 = vector.broadcast %183 : f32 to vector<8x128xf32>
    %185 = arith.mulf %184, %165 : vector<8x128xf32>
    %186 = arith.addf %156, %185 : vector<8x128xf32>
    %c0_i32_55 = arith.constant 0 : i32
    %187 = arith.addi %0, %c0_i32_55 : i32
    %188 = arith.index_cast %187 : i32 to index
    %c23 = arith.constant 23 : index
    %189 = memref.load %arg1[%188, %c23] : memref<4x32xf32, #tpu.memory_space<smem>>
    %190 = arith.mulf %189, %9 : f32
    %191 = vector.broadcast %190 : f32 to vector<8x128xf32>
    %192 = arith.mulf %191, %165 : vector<8x128xf32>
    %193 = arith.addf %163, %192 : vector<8x128xf32>
    %c0_56 = arith.constant 0 : index
    %c6_57 = arith.constant 6 : index
    %c0_58 = arith.constant 0 : index
    %c0_59 = arith.constant 0 : index
    %194 = vector.load %arg3[%c0_56, %c6_57, %c0_58, %c0_59] : memref<4x8x8x128xf32, #tpu.memory_space<vmem>>, vector<1x1x8x128xf32>
    %195 = vector.shape_cast %194 : vector<1x1x8x128xf32> to vector<8x128xf32>
    %c0_i32_60 = arith.constant 0 : i32
    %196 = arith.addi %0, %c0_i32_60 : i32
    %197 = arith.index_cast %196 : i32 to index
    %c24 = arith.constant 24 : index
    %198 = memref.load %arg1[%197, %c24] : memref<4x32xf32, #tpu.memory_space<smem>>
    %199 = arith.mulf %198, %3 : f32
    %200 = vector.broadcast %199 : f32 to vector<8x128xf32>
    %201 = arith.mulf %200, %195 : vector<8x128xf32>
    %202 = arith.addf %172, %201 : vector<8x128xf32>
    %c0_i32_61 = arith.constant 0 : i32
    %203 = arith.addi %0, %c0_i32_61 : i32
    %204 = arith.index_cast %203 : i32 to index
    %c25 = arith.constant 25 : index
    %205 = memref.load %arg1[%204, %c25] : memref<4x32xf32, #tpu.memory_space<smem>>
    %206 = arith.mulf %205, %6 : f32
    %207 = vector.broadcast %206 : f32 to vector<8x128xf32>
    %208 = arith.mulf %207, %195 : vector<8x128xf32>
    %209 = arith.addf %179, %208 : vector<8x128xf32>
    %c0_i32_62 = arith.constant 0 : i32
    %210 = arith.addi %0, %c0_i32_62 : i32
    %211 = arith.index_cast %210 : i32 to index
    %c26 = arith.constant 26 : index
    %212 = memref.load %arg1[%211, %c26] : memref<4x32xf32, #tpu.memory_space<smem>>
    %213 = arith.mulf %212, %9 : f32
    %214 = vector.broadcast %213 : f32 to vector<8x128xf32>
    %215 = arith.mulf %214, %195 : vector<8x128xf32>
    %216 = arith.addf %186, %215 : vector<8x128xf32>
    %c0_i32_63 = arith.constant 0 : i32
    %217 = arith.addi %0, %c0_i32_63 : i32
    %218 = arith.index_cast %217 : i32 to index
    %c27 = arith.constant 27 : index
    %219 = memref.load %arg1[%218, %c27] : memref<4x32xf32, #tpu.memory_space<smem>>
    %220 = arith.mulf %219, %9 : f32
    %221 = vector.broadcast %220 : f32 to vector<8x128xf32>
    %222 = arith.mulf %221, %195 : vector<8x128xf32>
    %223 = arith.addf %193, %222 : vector<8x128xf32>
    %c0_64 = arith.constant 0 : index
    %c7_65 = arith.constant 7 : index
    %c0_66 = arith.constant 0 : index
    %c0_67 = arith.constant 0 : index
    %224 = vector.load %arg3[%c0_64, %c7_65, %c0_66, %c0_67] : memref<4x8x8x128xf32, #tpu.memory_space<vmem>>, vector<1x1x8x128xf32>
    %225 = vector.shape_cast %224 : vector<1x1x8x128xf32> to vector<8x128xf32>
    %c0_i32_68 = arith.constant 0 : i32
    %226 = arith.addi %0, %c0_i32_68 : i32
    %227 = arith.index_cast %226 : i32 to index
    %c28 = arith.constant 28 : index
    %228 = memref.load %arg1[%227, %c28] : memref<4x32xf32, #tpu.memory_space<smem>>
    %229 = arith.mulf %228, %3 : f32
    %230 = vector.broadcast %229 : f32 to vector<8x128xf32>
    %231 = arith.mulf %230, %225 : vector<8x128xf32>
    %232 = arith.addf %202, %231 : vector<8x128xf32>
    %c0_i32_69 = arith.constant 0 : i32
    %233 = arith.addi %0, %c0_i32_69 : i32
    %234 = arith.index_cast %233 : i32 to index
    %c29 = arith.constant 29 : index
    %235 = memref.load %arg1[%234, %c29] : memref<4x32xf32, #tpu.memory_space<smem>>
    %236 = arith.mulf %235, %6 : f32
    %237 = vector.broadcast %236 : f32 to vector<8x128xf32>
    %238 = arith.mulf %237, %225 : vector<8x128xf32>
    %239 = arith.addf %209, %238 : vector<8x128xf32>
    %c0_i32_70 = arith.constant 0 : i32
    %240 = arith.addi %0, %c0_i32_70 : i32
    %241 = arith.index_cast %240 : i32 to index
    %c30 = arith.constant 30 : index
    %242 = memref.load %arg1[%241, %c30] : memref<4x32xf32, #tpu.memory_space<smem>>
    %243 = arith.mulf %242, %9 : f32
    %244 = vector.broadcast %243 : f32 to vector<8x128xf32>
    %245 = arith.mulf %244, %225 : vector<8x128xf32>
    %246 = arith.addf %216, %245 : vector<8x128xf32>
    %c0_i32_71 = arith.constant 0 : i32
    %247 = arith.addi %0, %c0_i32_71 : i32
    %248 = arith.index_cast %247 : i32 to index
    %c31 = arith.constant 31 : index
    %249 = memref.load %arg1[%248, %c31] : memref<4x32xf32, #tpu.memory_space<smem>>
    %250 = arith.mulf %249, %9 : f32
    %251 = vector.broadcast %250 : f32 to vector<8x128xf32>
    %252 = arith.mulf %251, %225 : vector<8x128xf32>
    %253 = arith.addf %223, %252 : vector<8x128xf32>
    %c0_72 = arith.constant 0 : index
    %c0_73 = arith.constant 0 : index
    %254 = vector.load %arg8[%c0_72, %c0_73] : memref<32x512xf32, #tpu.memory_space<vmem>>, vector<8x128xf32>
    tpu.vector_store %arg8[%c0_72, %c0_73], %232 {strides = array<i32>} : memref<32x512xf32, #tpu.memory_space<vmem>>, vector<8x128xf32>,
    %c0_74 = arith.constant 0 : index
    %c128 = arith.constant 128 : index
    %255 = vector.load %arg8[%c0_74, %c128] : memref<32x512xf32, #tpu.memory_space<vmem>>, vector<8x128xf32>
    tpu.vector_store %arg8[%c0_74, %c128], %239 {strides = array<i32>} : memref<32x512xf32, #tpu.memory_space<vmem>>, vector<8x128xf32>,
    %c0_75 = arith.constant 0 : index
    %c256 = arith.constant 256 : index
    %256 = vector.load %arg8[%c0_75, %c256] : memref<32x512xf32, #tpu.memory_space<vmem>>, vector<8x128xf32>
    tpu.vector_store %arg8[%c0_75, %c256], %246 {strides = array<i32>} : memref<32x512xf32, #tpu.memory_space<vmem>>, vector<8x128xf32>,
    %c0_76 = arith.constant 0 : index
    %c384 = arith.constant 384 : index
    %257 = vector.load %arg8[%c0_76, %c384] : memref<32x512xf32, #tpu.memory_space<vmem>>, vector<8x128xf32>
    tpu.vector_store %arg8[%c0_76, %c384], %253 {strides = array<i32>} : memref<32x512xf32, #tpu.memory_space<vmem>>, vector<8x128xf32>,
    %c1_i32 = arith.constant 1 : i32
    %258 = arith.addi %0, %c1_i32 : i32
    %259 = arith.index_cast %258 : i32 to index
    %c0_77 = arith.constant 0 : index
    %260 = memref.load %arg2[%259, %c0_77] : memref<4x3xf32, #tpu.memory_space<smem>>
    %c1_i32_78 = arith.constant 1 : i32
    %261 = arith.addi %0, %c1_i32_78 : i32
    %262 = arith.index_cast %261 : i32 to index
    %c1_79 = arith.constant 1 : index
    %263 = memref.load %arg2[%262, %c1_79] : memref<4x3xf32, #tpu.memory_space<smem>>
    %c1_i32_80 = arith.constant 1 : i32
    %264 = arith.addi %0, %c1_i32_80 : i32
    %265 = arith.index_cast %264 : i32 to index
    %c2_81 = arith.constant 2 : index
    %266 = memref.load %arg2[%265, %c2_81] : memref<4x3xf32, #tpu.memory_space<smem>>
    %cst_82 = arith.constant 0.000000e+00 : f32
    %267 = vector.broadcast %cst_82 : f32 to vector<8x128xf32>
    %cst_83 = arith.constant 0.000000e+00 : f32
    %268 = vector.broadcast %cst_83 : f32 to vector<8x128xf32>
    %cst_84 = arith.constant 0.000000e+00 : f32
    %269 = vector.broadcast %cst_84 : f32 to vector<8x128xf32>
    %cst_85 = arith.constant 0.000000e+00 : f32
    %270 = vector.broadcast %cst_85 : f32 to vector<8x128xf32>
    %c1_86 = arith.constant 1 : index
    %c0_87 = arith.constant 0 : index
    %c0_88 = arith.constant 0 : index
    %c0_89 = arith.constant 0 : index
    %271 = vector.load %arg3[%c1_86, %c0_87, %c0_88, %c0_89] : memref<4x8x8x128xf32, #tpu.memory_space<vmem>>, vector<1x1x8x128xf32>
    %272 = vector.shape_cast %271 : vector<1x1x8x128xf32> to vector<8x128xf32>
    %c1_i32_90 = arith.constant 1 : i32
    %273 = arith.addi %0, %c1_i32_90 : i32
    %274 = arith.index_cast %273 : i32 to index
    %c0_91 = arith.constant 0 : index
    %275 = memref.load %arg1[%274, %c0_91] : memref<4x32xf32, #tpu.memory_space<smem>>
    %276 = arith.mulf %275, %260 : f32
    %277 = vector.broadcast %276 : f32 to vector<8x128xf32>
    %278 = arith.mulf %277, %272 : vector<8x128xf32>
    %279 = arith.addf %267, %278 : vector<8x128xf32>
    %c1_i32_92 = arith.constant 1 : i32
    %280 = arith.addi %0, %c1_i32_92 : i32
    %281 = arith.index_cast %280 : i32 to index
    %c1_93 = arith.constant 1 : index
    %282 = memref.load %arg1[%281, %c1_93] : memref<4x32xf32, #tpu.memory_space<smem>>
    %283 = arith.mulf %282, %263 : f32
    %284 = vector.broadcast %283 : f32 to vector<8x128xf32>
    %285 = arith.mulf %284, %272 : vector<8x128xf32>
    %286 = arith.addf %268, %285 : vector<8x128xf32>
    %c1_i32_94 = arith.constant 1 : i32
    %287 = arith.addi %0, %c1_i32_94 : i32
    %288 = arith.index_cast %287 : i32 to index
    %c2_95 = arith.constant 2 : index
    %289 = memref.load %arg1[%288, %c2_95] : memref<4x32xf32, #tpu.memory_space<smem>>
    %290 = arith.mulf %289, %266 : f32
    %291 = vector.broadcast %290 : f32 to vector<8x128xf32>
    %292 = arith.mulf %291, %272 : vector<8x128xf32>
    %293 = arith.addf %269, %292 : vector<8x128xf32>
    %c1_i32_96 = arith.constant 1 : i32
    %294 = arith.addi %0, %c1_i32_96 : i32
    %295 = arith.index_cast %294 : i32 to index
    %c3_97 = arith.constant 3 : index
    %296 = memref.load %arg1[%295, %c3_97] : memref<4x32xf32, #tpu.memory_space<smem>>
    %297 = arith.mulf %296, %266 : f32
    %298 = vector.broadcast %297 : f32 to vector<8x128xf32>
    %299 = arith.mulf %298, %272 : vector<8x128xf32>
    %300 = arith.addf %270, %299 : vector<8x128xf32>
    %c1_98 = arith.constant 1 : index
    %c1_99 = arith.constant 1 : index
    %c0_100 = arith.constant 0 : index
    %c0_101 = arith.constant 0 : index
    %301 = vector.load %arg3[%c1_98, %c1_99, %c0_100, %c0_101] : memref<4x8x8x128xf32, #tpu.memory_space<vmem>>, vector<1x1x8x128xf32>
    %302 = vector.shape_cast %301 : vector<1x1x8x128xf32> to vector<8x128xf32>
    %c1_i32_102 = arith.constant 1 : i32
    %303 = arith.addi %0, %c1_i32_102 : i32
    %304 = arith.index_cast %303 : i32 to index
    %c4_103 = arith.constant 4 : index
    %305 = memref.load %arg1[%304, %c4_103] : memref<4x32xf32, #tpu.memory_space<smem>>
    %306 = arith.mulf %305, %260 : f32
    %307 = vector.broadcast %306 : f32 to vector<8x128xf32>
    %308 = arith.mulf %307, %302 : vector<8x128xf32>
    %309 = arith.addf %279, %308 : vector<8x128xf32>
    %c1_i32_104 = arith.constant 1 : i32
    %310 = arith.addi %0, %c1_i32_104 : i32
    %311 = arith.index_cast %310 : i32 to index
    %c5_105 = arith.constant 5 : index
    %312 = memref.load %arg1[%311, %c5_105] : memref<4x32xf32, #tpu.memory_space<smem>>
    %313 = arith.mulf %312, %263 : f32
    %314 = vector.broadcast %313 : f32 to vector<8x128xf32>
    %315 = arith.mulf %314, %302 : vector<8x128xf32>
    %316 = arith.addf %286, %315 : vector<8x128xf32>
    %c1_i32_106 = arith.constant 1 : i32
    %317 = arith.addi %0, %c1_i32_106 : i32
    %318 = arith.index_cast %317 : i32 to index
    %c6_107 = arith.constant 6 : index
    %319 = memref.load %arg1[%318, %c6_107] : memref<4x32xf32, #tpu.memory_space<smem>>
    %320 = arith.mulf %319, %266 : f32
    %321 = vector.broadcast %320 : f32 to vector<8x128xf32>
    %322 = arith.mulf %321, %302 : vector<8x128xf32>
    %323 = arith.addf %293, %322 : vector<8x128xf32>
    %c1_i32_108 = arith.constant 1 : i32
    %324 = arith.addi %0, %c1_i32_108 : i32
    %325 = arith.index_cast %324 : i32 to index
    %c7_109 = arith.constant 7 : index
    %326 = memref.load %arg1[%325, %c7_109] : memref<4x32xf32, #tpu.memory_space<smem>>
    %327 = arith.mulf %326, %266 : f32
    %328 = vector.broadcast %327 : f32 to vector<8x128xf32>
    %329 = arith.mulf %328, %302 : vector<8x128xf32>
    %330 = arith.addf %300, %329 : vector<8x128xf32>
    %c1_110 = arith.constant 1 : index
    %c2_111 = arith.constant 2 : index
    %c0_112 = arith.constant 0 : index
    %c0_113 = arith.constant 0 : index
    %331 = vector.load %arg3[%c1_110, %c2_111, %c0_112, %c0_113] : memref<4x8x8x128xf32, #tpu.memory_space<vmem>>, vector<1x1x8x128xf32>
    %332 = vector.shape_cast %331 : vector<1x1x8x128xf32> to vector<8x128xf32>
    %c1_i32_114 = arith.constant 1 : i32
    %333 = arith.addi %0, %c1_i32_114 : i32
    %334 = arith.index_cast %333 : i32 to index
    %c8_115 = arith.constant 8 : index
    %335 = memref.load %arg1[%334, %c8_115] : memref<4x32xf32, #tpu.memory_space<smem>>
    %336 = arith.mulf %335, %260 : f32
    %337 = vector.broadcast %336 : f32 to vector<8x128xf32>
    %338 = arith.mulf %337, %332 : vector<8x128xf32>
    %339 = arith.addf %309, %338 : vector<8x128xf32>
    %c1_i32_116 = arith.constant 1 : i32
    %340 = arith.addi %0, %c1_i32_116 : i32
    %341 = arith.index_cast %340 : i32 to index
    %c9_117 = arith.constant 9 : index
    %342 = memref.load %arg1[%341, %c9_117] : memref<4x32xf32, #tpu.memory_space<smem>>
    %343 = arith.mulf %342, %263 : f32
    %344 = vector.broadcast %343 : f32 to vector<8x128xf32>
    %345 = arith.mulf %344, %332 : vector<8x128xf32>
    %346 = arith.addf %316, %345 : vector<8x128xf32>
    %c1_i32_118 = arith.constant 1 : i32
    %347 = arith.addi %0, %c1_i32_118 : i32
    %348 = arith.index_cast %347 : i32 to index
    %c10_119 = arith.constant 10 : index
    %349 = memref.load %arg1[%348, %c10_119] : memref<4x32xf32, #tpu.memory_space<smem>>
    %350 = arith.mulf %349, %266 : f32
    %351 = vector.broadcast %350 : f32 to vector<8x128xf32>
    %352 = arith.mulf %351, %332 : vector<8x128xf32>
    %353 = arith.addf %323, %352 : vector<8x128xf32>
    %c1_i32_120 = arith.constant 1 : i32
    %354 = arith.addi %0, %c1_i32_120 : i32
    %355 = arith.index_cast %354 : i32 to index
    %c11_121 = arith.constant 11 : index
    %356 = memref.load %arg1[%355, %c11_121] : memref<4x32xf32, #tpu.memory_space<smem>>
    %357 = arith.mulf %356, %266 : f32
    %358 = vector.broadcast %357 : f32 to vector<8x128xf32>
    %359 = arith.mulf %358, %332 : vector<8x128xf32>
    %360 = arith.addf %330, %359 : vector<8x128xf32>
    %c1_122 = arith.constant 1 : index
    %c3_123 = arith.constant 3 : index
    %c0_124 = arith.constant 0 : index
    %c0_125 = arith.constant 0 : index
    %361 = vector.load %arg3[%c1_122, %c3_123, %c0_124, %c0_125] : memref<4x8x8x128xf32, #tpu.memory_space<vmem>>, vector<1x1x8x128xf32>
    %362 = vector.shape_cast %361 : vector<1x1x8x128xf32> to vector<8x128xf32>
    %c1_i32_126 = arith.constant 1 : i32
    %363 = arith.addi %0, %c1_i32_126 : i32
    %364 = arith.index_cast %363 : i32 to index
    %c12_127 = arith.constant 12 : index
    %365 = memref.load %arg1[%364, %c12_127] : memref<4x32xf32, #tpu.memory_space<smem>>
    %366 = arith.mulf %365, %260 : f32
    %367 = vector.broadcast %366 : f32 to vector<8x128xf32>
    %368 = arith.mulf %367, %362 : vector<8x128xf32>
    %369 = arith.addf %339, %368 : vector<8x128xf32>
    %c1_i32_128 = arith.constant 1 : i32
    %370 = arith.addi %0, %c1_i32_128 : i32
    %371 = arith.index_cast %370 : i32 to index
    %c13_129 = arith.constant 13 : index
    %372 = memref.load %arg1[%371, %c13_129] : memref<4x32xf32, #tpu.memory_space<smem>>
    %373 = arith.mulf %372, %263 : f32
    %374 = vector.broadcast %373 : f32 to vector<8x128xf32>
    %375 = arith.mulf %374, %362 : vector<8x128xf32>
    %376 = arith.addf %346, %375 : vector<8x128xf32>
    %c1_i32_130 = arith.constant 1 : i32
    %377 = arith.addi %0, %c1_i32_130 : i32
    %378 = arith.index_cast %377 : i32 to index
    %c14_131 = arith.constant 14 : index
    %379 = memref.load %arg1[%378, %c14_131] : memref<4x32xf32, #tpu.memory_space<smem>>
    %380 = arith.mulf %379, %266 : f32
    %381 = vector.broadcast %380 : f32 to vector<8x128xf32>
    %382 = arith.mulf %381, %362 : vector<8x128xf32>
    %383 = arith.addf %353, %382 : vector<8x128xf32>
    %c1_i32_132 = arith.constant 1 : i32
    %384 = arith.addi %0, %c1_i32_132 : i32
    %385 = arith.index_cast %384 : i32 to index
    %c15_133 = arith.constant 15 : index
    %386 = memref.load %arg1[%385, %c15_133] : memref<4x32xf32, #tpu.memory_space<smem>>
    %387 = arith.mulf %386, %266 : f32
    %388 = vector.broadcast %387 : f32 to vector<8x128xf32>
    %389 = arith.mulf %388, %362 : vector<8x128xf32>
    %390 = arith.addf %360, %389 : vector<8x128xf32>
    %c1_134 = arith.constant 1 : index
    %c4_135 = arith.constant 4 : index
    %c0_136 = arith.constant 0 : index
    %c0_137 = arith.constant 0 : index
    %391 = vector.load %arg3[%c1_134, %c4_135, %c0_136, %c0_137] : memref<4x8x8x128xf32, #tpu.memory_space<vmem>>, vector<1x1x8x128xf32>
    %392 = vector.shape_cast %391 : vector<1x1x8x128xf32> to vector<8x128xf32>
    %c1_i32_138 = arith.constant 1 : i32
    %393 = arith.addi %0, %c1_i32_138 : i32
    %394 = arith.index_cast %393 : i32 to index
    %c16_139 = arith.constant 16 : index
    %395 = memref.load %arg1[%394, %c16_139] : memref<4x32xf32, #tpu.memory_space<smem>>
    %396 = arith.mulf %395, %260 : f32
    %397 = vector.broadcast %396 : f32 to vector<8x128xf32>
    %398 = arith.mulf %397, %392 : vector<8x128xf32>
    %399 = arith.addf %369, %398 : vector<8x128xf32>
    %c1_i32_140 = arith.constant 1 : i32
    %400 = arith.addi %0, %c1_i32_140 : i32
    %401 = arith.index_cast %400 : i32 to index
    %c17_141 = arith.constant 17 : index
    %402 = memref.load %arg1[%401, %c17_141] : memref<4x32xf32, #tpu.memory_space<smem>>
    %403 = arith.mulf %402, %263 : f32
    %404 = vector.broadcast %403 : f32 to vector<8x128xf32>
    %405 = arith.mulf %404, %392 : vector<8x128xf32>
    %406 = arith.addf %376, %405 : vector<8x128xf32>
    %c1_i32_142 = arith.constant 1 : i32
    %407 = arith.addi %0, %c1_i32_142 : i32
    %408 = arith.index_cast %407 : i32 to index
    %c18_143 = arith.constant 18 : index
    %409 = memref.load %arg1[%408, %c18_143] : memref<4x32xf32, #tpu.memory_space<smem>>
    %410 = arith.mulf %409, %266 : f32
    %411 = vector.broadcast %410 : f32 to vector<8x128xf32>
    %412 = arith.mulf %411, %392 : vector<8x128xf32>
    %413 = arith.addf %383, %412 : vector<8x128xf32>
    %c1_i32_144 = arith.constant 1 : i32
    %414 = arith.addi %0, %c1_i32_144 : i32
    %415 = arith.index_cast %414 : i32 to index
    %c19_145 = arith.constant 19 : index
    %416 = memref.load %arg1[%415, %c19_145] : memref<4x32xf32, #tpu.memory_space<smem>>
    %417 = arith.mulf %416, %266 : f32
    %418 = vector.broadcast %417 : f32 to vector<8x128xf32>
    %419 = arith.mulf %418, %392 : vector<8x128xf32>
    %420 = arith.addf %390, %419 : vector<8x128xf32>
    %c1_146 = arith.constant 1 : index
    %c5_147 = arith.constant 5 : index
    %c0_148 = arith.constant 0 : index
    %c0_149 = arith.constant 0 : index
    %421 = vector.load %arg3[%c1_146, %c5_147, %c0_148, %c0_149] : memref<4x8x8x128xf32, #tpu.memory_space<vmem>>, vector<1x1x8x128xf32>
    %422 = vector.shape_cast %421 : vector<1x1x8x128xf32> to vector<8x128xf32>
    %c1_i32_150 = arith.constant 1 : i32
    %423 = arith.addi %0, %c1_i32_150 : i32
    %424 = arith.index_cast %423 : i32 to index
    %c20_151 = arith.constant 20 : index
    %425 = memref.load %arg1[%424, %c20_151] : memref<4x32xf32, #tpu.memory_space<smem>>
    %426 = arith.mulf %425, %260 : f32
    %427 = vector.broadcast %426 : f32 to vector<8x128xf32>
    %428 = arith.mulf %427, %422 : vector<8x128xf32>
    %429 = arith.addf %399, %428 : vector<8x128xf32>
    %c1_i32_152 = arith.constant 1 : i32
    %430 = arith.addi %0, %c1_i32_152 : i32
    %431 = arith.index_cast %430 : i32 to index
    %c21_153 = arith.constant 21 : index
    %432 = memref.load %arg1[%431, %c21_153] : memref<4x32xf32, #tpu.memory_space<smem>>
    %433 = arith.mulf %432, %263 : f32
    %434 = vector.broadcast %433 : f32 to vector<8x128xf32>
    %435 = arith.mulf %434, %422 : vector<8x128xf32>
    %436 = arith.addf %406, %435 : vector<8x128xf32>
    %c1_i32_154 = arith.constant 1 : i32
    %437 = arith.addi %0, %c1_i32_154 : i32
    %438 = arith.index_cast %437 : i32 to index
    %c22_155 = arith.constant 22 : index
    %439 = memref.load %arg1[%438, %c22_155] : memref<4x32xf32, #tpu.memory_space<smem>>
    %440 = arith.mulf %439, %266 : f32
    %441 = vector.broadcast %440 : f32 to vector<8x128xf32>
    %442 = arith.mulf %441, %422 : vector<8x128xf32>
    %443 = arith.addf %413, %442 : vector<8x128xf32>
    %c1_i32_156 = arith.constant 1 : i32
    %444 = arith.addi %0, %c1_i32_156 : i32
    %445 = arith.index_cast %444 : i32 to index
    %c23_157 = arith.constant 23 : index
    %446 = memref.load %arg1[%445, %c23_157] : memref<4x32xf32, #tpu.memory_space<smem>>
    %447 = arith.mulf %446, %266 : f32
    %448 = vector.broadcast %447 : f32 to vector<8x128xf32>
    %449 = arith.mulf %448, %422 : vector<8x128xf32>
    %450 = arith.addf %420, %449 : vector<8x128xf32>
    %c1_158 = arith.constant 1 : index
    %c6_159 = arith.constant 6 : index
    %c0_160 = arith.constant 0 : index
    %c0_161 = arith.constant 0 : index
    %451 = vector.load %arg3[%c1_158, %c6_159, %c0_160, %c0_161] : memref<4x8x8x128xf32, #tpu.memory_space<vmem>>, vector<1x1x8x128xf32>
    %452 = vector.shape_cast %451 : vector<1x1x8x128xf32> to vector<8x128xf32>
    %c1_i32_162 = arith.constant 1 : i32
    %453 = arith.addi %0, %c1_i32_162 : i32
    %454 = arith.index_cast %453 : i32 to index
    %c24_163 = arith.constant 24 : index
    %455 = memref.load %arg1[%454, %c24_163] : memref<4x32xf32, #tpu.memory_space<smem>>
    %456 = arith.mulf %455, %260 : f32
    %457 = vector.broadcast %456 : f32 to vector<8x128xf32>
    %458 = arith.mulf %457, %452 : vector<8x128xf32>
    %459 = arith.addf %429, %458 : vector<8x128xf32>
    %c1_i32_164 = arith.constant 1 : i32
    %460 = arith.addi %0, %c1_i32_164 : i32
    %461 = arith.index_cast %460 : i32 to index
    %c25_165 = arith.constant 25 : index
    %462 = memref.load %arg1[%461, %c25_165] : memref<4x32xf32, #tpu.memory_space<smem>>
    %463 = arith.mulf %462, %263 : f32
    %464 = vector.broadcast %463 : f32 to vector<8x128xf32>
    %465 = arith.mulf %464, %452 : vector<8x128xf32>
    %466 = arith.addf %436, %465 : vector<8x128xf32>
    %c1_i32_166 = arith.constant 1 : i32
    %467 = arith.addi %0, %c1_i32_166 : i32
    %468 = arith.index_cast %467 : i32 to index
    %c26_167 = arith.constant 26 : index
    %469 = memref.load %arg1[%468, %c26_167] : memref<4x32xf32, #tpu.memory_space<smem>>
    %470 = arith.mulf %469, %266 : f32
    %471 = vector.broadcast %470 : f32 to vector<8x128xf32>
    %472 = arith.mulf %471, %452 : vector<8x128xf32>
    %473 = arith.addf %443, %472 : vector<8x128xf32>
    %c1_i32_168 = arith.constant 1 : i32
    %474 = arith.addi %0, %c1_i32_168 : i32
    %475 = arith.index_cast %474 : i32 to index
    %c27_169 = arith.constant 27 : index
    %476 = memref.load %arg1[%475, %c27_169] : memref<4x32xf32, #tpu.memory_space<smem>>
    %477 = arith.mulf %476, %266 : f32
    %478 = vector.broadcast %477 : f32 to vector<8x128xf32>
    %479 = arith.mulf %478, %452 : vector<8x128xf32>
    %480 = arith.addf %450, %479 : vector<8x128xf32>
    %c1_170 = arith.constant 1 : index
    %c7_171 = arith.constant 7 : index
    %c0_172 = arith.constant 0 : index
    %c0_173 = arith.constant 0 : index
    %481 = vector.load %arg3[%c1_170, %c7_171, %c0_172, %c0_173] : memref<4x8x8x128xf32, #tpu.memory_space<vmem>>, vector<1x1x8x128xf32>
    %482 = vector.shape_cast %481 : vector<1x1x8x128xf32> to vector<8x128xf32>
    %c1_i32_174 = arith.constant 1 : i32
    %483 = arith.addi %0, %c1_i32_174 : i32
    %484 = arith.index_cast %483 : i32 to index
    %c28_175 = arith.constant 28 : index
    %485 = memref.load %arg1[%484, %c28_175] : memref<4x32xf32, #tpu.memory_space<smem>>
    %486 = arith.mulf %485, %260 : f32
    %487 = vector.broadcast %486 : f32 to vector<8x128xf32>
    %488 = arith.mulf %487, %482 : vector<8x128xf32>
    %489 = arith.addf %459, %488 : vector<8x128xf32>
    %c1_i32_176 = arith.constant 1 : i32
    %490 = arith.addi %0, %c1_i32_176 : i32
    %491 = arith.index_cast %490 : i32 to index
    %c29_177 = arith.constant 29 : index
    %492 = memref.load %arg1[%491, %c29_177] : memref<4x32xf32, #tpu.memory_space<smem>>
    %493 = arith.mulf %492, %263 : f32
    %494 = vector.broadcast %493 : f32 to vector<8x128xf32>
    %495 = arith.mulf %494, %482 : vector<8x128xf32>
    %496 = arith.addf %466, %495 : vector<8x128xf32>
    %c1_i32_178 = arith.constant 1 : i32
    %497 = arith.addi %0, %c1_i32_178 : i32
    %498 = arith.index_cast %497 : i32 to index
    %c30_179 = arith.constant 30 : index
    %499 = memref.load %arg1[%498, %c30_179] : memref<4x32xf32, #tpu.memory_space<smem>>
    %500 = arith.mulf %499, %266 : f32
    %501 = vector.broadcast %500 : f32 to vector<8x128xf32>
    %502 = arith.mulf %501, %482 : vector<8x128xf32>
    %503 = arith.addf %473, %502 : vector<8x128xf32>
    %c1_i32_180 = arith.constant 1 : i32
    %504 = arith.addi %0, %c1_i32_180 : i32
    %505 = arith.index_cast %504 : i32 to index
    %c31_181 = arith.constant 31 : index
    %506 = memref.load %arg1[%505, %c31_181] : memref<4x32xf32, #tpu.memory_space<smem>>
    %507 = arith.mulf %506, %266 : f32
    %508 = vector.broadcast %507 : f32 to vector<8x128xf32>
    %509 = arith.mulf %508, %482 : vector<8x128xf32>
    %510 = arith.addf %480, %509 : vector<8x128xf32>
    %c8_182 = arith.constant 8 : index
    %c0_183 = arith.constant 0 : index
    %511 = vector.load %arg8[%c8_182, %c0_183] : memref<32x512xf32, #tpu.memory_space<vmem>>, vector<8x128xf32>
    tpu.vector_store %arg8[%c8_182, %c0_183], %489 {strides = array<i32>} : memref<32x512xf32, #tpu.memory_space<vmem>>, vector<8x128xf32>,
    %c8_184 = arith.constant 8 : index
    %c128_185 = arith.constant 128 : index
    %512 = vector.load %arg8[%c8_184, %c128_185] : memref<32x512xf32, #tpu.memory_space<vmem>>, vector<8x128xf32>
    tpu.vector_store %arg8[%c8_184, %c128_185], %496 {strides = array<i32>} : memref<32x512xf32, #tpu.memory_space<vmem>>, vector<8x128xf32>,
    %c8_186 = arith.constant 8 : index
    %c256_187 = arith.constant 256 : index
    %513 = vector.load %arg8[%c8_186, %c256_187] : memref<32x512xf32, #tpu.memory_space<vmem>>, vector<8x128xf32>
    tpu.vector_store %arg8[%c8_186, %c256_187], %503 {strides = array<i32>} : memref<32x512xf32, #tpu.memory_space<vmem>>, vector<8x128xf32>,
    %c8_188 = arith.constant 8 : index
    %c384_189 = arith.constant 384 : index
    %514 = vector.load %arg8[%c8_188, %c384_189] : memref<32x512xf32, #tpu.memory_space<vmem>>, vector<8x128xf32>
    tpu.vector_store %arg8[%c8_188, %c384_189], %510 {strides = array<i32>} : memref<32x512xf32, #tpu.memory_space<vmem>>, vector<8x128xf32>,
    %c2_i32 = arith.constant 2 : i32
    %515 = arith.addi %0, %c2_i32 : i32
    %516 = arith.index_cast %515 : i32 to index
    %c0_190 = arith.constant 0 : index
    %517 = memref.load %arg2[%516, %c0_190] : memref<4x3xf32, #tpu.memory_space<smem>>
    %c2_i32_191 = arith.constant 2 : i32
    %518 = arith.addi %0, %c2_i32_191 : i32
    %519 = arith.index_cast %518 : i32 to index
    %c1_192 = arith.constant 1 : index
    %520 = memref.load %arg2[%519, %c1_192] : memref<4x3xf32, #tpu.memory_space<smem>>
    %c2_i32_193 = arith.constant 2 : i32
    %521 = arith.addi %0, %c2_i32_193 : i32
    %522 = arith.index_cast %521 : i32 to index
    %c2_194 = arith.constant 2 : index
    %523 = memref.load %arg2[%522, %c2_194] : memref<4x3xf32, #tpu.memory_space<smem>>
    %cst_195 = arith.constant 0.000000e+00 : f32
    %524 = vector.broadcast %cst_195 : f32 to vector<8x128xf32>
    %cst_196 = arith.constant 0.000000e+00 : f32
    %525 = vector.broadcast %cst_196 : f32 to vector<8x128xf32>
    %cst_197 = arith.constant 0.000000e+00 : f32
    %526 = vector.broadcast %cst_197 : f32 to vector<8x128xf32>
    %cst_198 = arith.constant 0.000000e+00 : f32
    %527 = vector.broadcast %cst_198 : f32 to vector<8x128xf32>
    %c2_199 = arith.constant 2 : index
    %c0_200 = arith.constant 0 : index
    %c0_201 = arith.constant 0 : index
    %c0_202 = arith.constant 0 : index
    %528 = vector.load %arg3[%c2_199, %c0_200, %c0_201, %c0_202] : memref<4x8x8x128xf32, #tpu.memory_space<vmem>>, vector<1x1x8x128xf32>
    %529 = vector.shape_cast %528 : vector<1x1x8x128xf32> to vector<8x128xf32>
    %c2_i32_203 = arith.constant 2 : i32
    %530 = arith.addi %0, %c2_i32_203 : i32
    %531 = arith.index_cast %530 : i32 to index
    %c0_204 = arith.constant 0 : index
    %532 = memref.load %arg1[%531, %c0_204] : memref<4x32xf32, #tpu.memory_space<smem>>
    %533 = arith.mulf %532, %517 : f32
    %534 = vector.broadcast %533 : f32 to vector<8x128xf32>
    %535 = arith.mulf %534, %529 : vector<8x128xf32>
    %536 = arith.addf %524, %535 : vector<8x128xf32>
    %c2_i32_205 = arith.constant 2 : i32
    %537 = arith.addi %0, %c2_i32_205 : i32
    %538 = arith.index_cast %537 : i32 to index
    %c1_206 = arith.constant 1 : index
    %539 = memref.load %arg1[%538, %c1_206] : memref<4x32xf32, #tpu.memory_space<smem>>
    %540 = arith.mulf %539, %520 : f32
    %541 = vector.broadcast %540 : f32 to vector<8x128xf32>
    %542 = arith.mulf %541, %529 : vector<8x128xf32>
    %543 = arith.addf %525, %542 : vector<8x128xf32>
    %c2_i32_207 = arith.constant 2 : i32
    %544 = arith.addi %0, %c2_i32_207 : i32
    %545 = arith.index_cast %544 : i32 to index
    %c2_208 = arith.constant 2 : index
    %546 = memref.load %arg1[%545, %c2_208] : memref<4x32xf32, #tpu.memory_space<smem>>
    %547 = arith.mulf %546, %523 : f32
    %548 = vector.broadcast %547 : f32 to vector<8x128xf32>
    %549 = arith.mulf %548, %529 : vector<8x128xf32>
    %550 = arith.addf %526, %549 : vector<8x128xf32>
    %c2_i32_209 = arith.constant 2 : i32
    %551 = arith.addi %0, %c2_i32_209 : i32
    %552 = arith.index_cast %551 : i32 to index
    %c3_210 = arith.constant 3 : index
    %553 = memref.load %arg1[%552, %c3_210] : memref<4x32xf32, #tpu.memory_space<smem>>
    %554 = arith.mulf %553, %523 : f32
    %555 = vector.broadcast %554 : f32 to vector<8x128xf32>
    %556 = arith.mulf %555, %529 : vector<8x128xf32>
    %557 = arith.addf %527, %556 : vector<8x128xf32>
    %c2_211 = arith.constant 2 : index
    %c1_212 = arith.constant 1 : index
    %c0_213 = arith.constant 0 : index
    %c0_214 = arith.constant 0 : index
    %558 = vector.load %arg3[%c2_211, %c1_212, %c0_213, %c0_214] : memref<4x8x8x128xf32, #tpu.memory_space<vmem>>, vector<1x1x8x128xf32>
    %559 = vector.shape_cast %558 : vector<1x1x8x128xf32> to vector<8x128xf32>
    %c2_i32_215 = arith.constant 2 : i32
    %560 = arith.addi %0, %c2_i32_215 : i32
    %561 = arith.index_cast %560 : i32 to index
    %c4_216 = arith.constant 4 : index
    %562 = memref.load %arg1[%561, %c4_216] : memref<4x32xf32, #tpu.memory_space<smem>>
    %563 = arith.mulf %562, %517 : f32
    %564 = vector.broadcast %563 : f32 to vector<8x128xf32>
    %565 = arith.mulf %564, %559 : vector<8x128xf32>
    %566 = arith.addf %536, %565 : vector<8x128xf32>
    %c2_i32_217 = arith.constant 2 : i32
    %567 = arith.addi %0, %c2_i32_217 : i32
    %568 = arith.index_cast %567 : i32 to index
    %c5_218 = arith.constant 5 : index
    %569 = memref.load %arg1[%568, %c5_218] : memref<4x32xf32, #tpu.memory_space<smem>>
    %570 = arith.mulf %569, %520 : f32
    %571 = vector.broadcast %570 : f32 to vector<8x128xf32>
    %572 = arith.mulf %571, %559 : vector<8x128xf32>
    %573 = arith.addf %543, %572 : vector<8x128xf32>
    %c2_i32_219 = arith.constant 2 : i32
    %574 = arith.addi %0, %c2_i32_219 : i32
    %575 = arith.index_cast %574 : i32 to index
    %c6_220 = arith.constant 6 : index
    %576 = memref.load %arg1[%575, %c6_220] : memref<4x32xf32, #tpu.memory_space<smem>>
    %577 = arith.mulf %576, %523 : f32
    %578 = vector.broadcast %577 : f32 to vector<8x128xf32>
    %579 = arith.mulf %578, %559 : vector<8x128xf32>
    %580 = arith.addf %550, %579 : vector<8x128xf32>
    %c2_i32_221 = arith.constant 2 : i32
    %581 = arith.addi %0, %c2_i32_221 : i32
    %582 = arith.index_cast %581 : i32 to index
    %c7_222 = arith.constant 7 : index
    %583 = memref.load %arg1[%582, %c7_222] : memref<4x32xf32, #tpu.memory_space<smem>>
    %584 = arith.mulf %583, %523 : f32
    %585 = vector.broadcast %584 : f32 to vector<8x128xf32>
    %586 = arith.mulf %585, %559 : vector<8x128xf32>
    %587 = arith.addf %557, %586 : vector<8x128xf32>
    %c2_223 = arith.constant 2 : index
    %c2_224 = arith.constant 2 : index
    %c0_225 = arith.constant 0 : index
    %c0_226 = arith.constant 0 : index
    %588 = vector.load %arg3[%c2_223, %c2_224, %c0_225, %c0_226] : memref<4x8x8x128xf32, #tpu.memory_space<vmem>>, vector<1x1x8x128xf32>
    %589 = vector.shape_cast %588 : vector<1x1x8x128xf32> to vector<8x128xf32>
    %c2_i32_227 = arith.constant 2 : i32
    %590 = arith.addi %0, %c2_i32_227 : i32
    %591 = arith.index_cast %590 : i32 to index
    %c8_228 = arith.constant 8 : index
    %592 = memref.load %arg1[%591, %c8_228] : memref<4x32xf32, #tpu.memory_space<smem>>
    %593 = arith.mulf %592, %517 : f32
    %594 = vector.broadcast %593 : f32 to vector<8x128xf32>
    %595 = arith.mulf %594, %589 : vector<8x128xf32>
    %596 = arith.addf %566, %595 : vector<8x128xf32>
    %c2_i32_229 = arith.constant 2 : i32
    %597 = arith.addi %0, %c2_i32_229 : i32
    %598 = arith.index_cast %597 : i32 to index
    %c9_230 = arith.constant 9 : index
    %599 = memref.load %arg1[%598, %c9_230] : memref<4x32xf32, #tpu.memory_space<smem>>
    %600 = arith.mulf %599, %520 : f32
    %601 = vector.broadcast %600 : f32 to vector<8x128xf32>
    %602 = arith.mulf %601, %589 : vector<8x128xf32>
    %603 = arith.addf %573, %602 : vector<8x128xf32>
    %c2_i32_231 = arith.constant 2 : i32
    %604 = arith.addi %0, %c2_i32_231 : i32
    %605 = arith.index_cast %604 : i32 to index
    %c10_232 = arith.constant 10 : index
    %606 = memref.load %arg1[%605, %c10_232] : memref<4x32xf32, #tpu.memory_space<smem>>
    %607 = arith.mulf %606, %523 : f32
    %608 = vector.broadcast %607 : f32 to vector<8x128xf32>
    %609 = arith.mulf %608, %589 : vector<8x128xf32>
    %610 = arith.addf %580, %609 : vector<8x128xf32>
    %c2_i32_233 = arith.constant 2 : i32
    %611 = arith.addi %0, %c2_i32_233 : i32
    %612 = arith.index_cast %611 : i32 to index
    %c11_234 = arith.constant 11 : index
    %613 = memref.load %arg1[%612, %c11_234] : memref<4x32xf32, #tpu.memory_space<smem>>
    %614 = arith.mulf %613, %523 : f32
    %615 = vector.broadcast %614 : f32 to vector<8x128xf32>
    %616 = arith.mulf %615, %589 : vector<8x128xf32>
    %617 = arith.addf %587, %616 : vector<8x128xf32>
    %c2_235 = arith.constant 2 : index
    %c3_236 = arith.constant 3 : index
    %c0_237 = arith.constant 0 : index
    %c0_238 = arith.constant 0 : index
    %618 = vector.load %arg3[%c2_235, %c3_236, %c0_237, %c0_238] : memref<4x8x8x128xf32, #tpu.memory_space<vmem>>, vector<1x1x8x128xf32>
    %619 = vector.shape_cast %618 : vector<1x1x8x128xf32> to vector<8x128xf32>
    %c2_i32_239 = arith.constant 2 : i32
    %620 = arith.addi %0, %c2_i32_239 : i32
    %621 = arith.index_cast %620 : i32 to index
    %c12_240 = arith.constant 12 : index
    %622 = memref.load %arg1[%621, %c12_240] : memref<4x32xf32, #tpu.memory_space<smem>>
    %623 = arith.mulf %622, %517 : f32
    %624 = vector.broadcast %623 : f32 to vector<8x128xf32>
    %625 = arith.mulf %624, %619 : vector<8x128xf32>
    %626 = arith.addf %596, %625 : vector<8x128xf32>
    %c2_i32_241 = arith.constant 2 : i32
    %627 = arith.addi %0, %c2_i32_241 : i32
    %628 = arith.index_cast %627 : i32 to index
    %c13_242 = arith.constant 13 : index
    %629 = memref.load %arg1[%628, %c13_242] : memref<4x32xf32, #tpu.memory_space<smem>>
    %630 = arith.mulf %629, %520 : f32
    %631 = vector.broadcast %630 : f32 to vector<8x128xf32>
    %632 = arith.mulf %631, %619 : vector<8x128xf32>
    %633 = arith.addf %603, %632 : vector<8x128xf32>
    %c2_i32_243 = arith.constant 2 : i32
    %634 = arith.addi %0, %c2_i32_243 : i32
    %635 = arith.index_cast %634 : i32 to index
    %c14_244 = arith.constant 14 : index
    %636 = memref.load %arg1[%635, %c14_244] : memref<4x32xf32, #tpu.memory_space<smem>>
    %637 = arith.mulf %636, %523 : f32
    %638 = vector.broadcast %637 : f32 to vector<8x128xf32>
    %639 = arith.mulf %638, %619 : vector<8x128xf32>
    %640 = arith.addf %610, %639 : vector<8x128xf32>
    %c2_i32_245 = arith.constant 2 : i32
    %641 = arith.addi %0, %c2_i32_245 : i32
    %642 = arith.index_cast %641 : i32 to index
    %c15_246 = arith.constant 15 : index
    %643 = memref.load %arg1[%642, %c15_246] : memref<4x32xf32, #tpu.memory_space<smem>>
    %644 = arith.mulf %643, %523 : f32
    %645 = vector.broadcast %644 : f32 to vector<8x128xf32>
    %646 = arith.mulf %645, %619 : vector<8x128xf32>
    %647 = arith.addf %617, %646 : vector<8x128xf32>
    %c2_247 = arith.constant 2 : index
    %c4_248 = arith.constant 4 : index
    %c0_249 = arith.constant 0 : index
    %c0_250 = arith.constant 0 : index
    %648 = vector.load %arg3[%c2_247, %c4_248, %c0_249, %c0_250] : memref<4x8x8x128xf32, #tpu.memory_space<vmem>>, vector<1x1x8x128xf32>
    %649 = vector.shape_cast %648 : vector<1x1x8x128xf32> to vector<8x128xf32>
    %c2_i32_251 = arith.constant 2 : i32
    %650 = arith.addi %0, %c2_i32_251 : i32
    %651 = arith.index_cast %650 : i32 to index
    %c16_252 = arith.constant 16 : index
    %652 = memref.load %arg1[%651, %c16_252] : memref<4x32xf32, #tpu.memory_space<smem>>
    %653 = arith.mulf %652, %517 : f32
    %654 = vector.broadcast %653 : f32 to vector<8x128xf32>
    %655 = arith.mulf %654, %649 : vector<8x128xf32>
    %656 = arith.addf %626, %655 : vector<8x128xf32>
    %c2_i32_253 = arith.constant 2 : i32
    %657 = arith.addi %0, %c2_i32_253 : i32
    %658 = arith.index_cast %657 : i32 to index
    %c17_254 = arith.constant 17 : index
    %659 = memref.load %arg1[%658, %c17_254] : memref<4x32xf32, #tpu.memory_space<smem>>
    %660 = arith.mulf %659, %520 : f32
    %661 = vector.broadcast %660 : f32 to vector<8x128xf32>
    %662 = arith.mulf %661, %649 : vector<8x128xf32>
    %663 = arith.addf %633, %662 : vector<8x128xf32>
    %c2_i32_255 = arith.constant 2 : i32
    %664 = arith.addi %0, %c2_i32_255 : i32
    %665 = arith.index_cast %664 : i32 to index
    %c18_256 = arith.constant 18 : index
    %666 = memref.load %arg1[%665, %c18_256] : memref<4x32xf32, #tpu.memory_space<smem>>
    %667 = arith.mulf %666, %523 : f32
    %668 = vector.broadcast %667 : f32 to vector<8x128xf32>
    %669 = arith.mulf %668, %649 : vector<8x128xf32>
    %670 = arith.addf %640, %669 : vector<8x128xf32>
    %c2_i32_257 = arith.constant 2 : i32
    %671 = arith.addi %0, %c2_i32_257 : i32
    %672 = arith.index_cast %671 : i32 to index
    %c19_258 = arith.constant 19 : index
    %673 = memref.load %arg1[%672, %c19_258] : memref<4x32xf32, #tpu.memory_space<smem>>
    %674 = arith.mulf %673, %523 : f32
    %675 = vector.broadcast %674 : f32 to vector<8x128xf32>
    %676 = arith.mulf %675, %649 : vector<8x128xf32>
    %677 = arith.addf %647, %676 : vector<8x128xf32>
    %c2_259 = arith.constant 2 : index
    %c5_260 = arith.constant 5 : index
    %c0_261 = arith.constant 0 : index
    %c0_262 = arith.constant 0 : index
    %678 = vector.load %arg3[%c2_259, %c5_260, %c0_261, %c0_262] : memref<4x8x8x128xf32, #tpu.memory_space<vmem>>, vector<1x1x8x128xf32>
    %679 = vector.shape_cast %678 : vector<1x1x8x128xf32> to vector<8x128xf32>
    %c2_i32_263 = arith.constant 2 : i32
    %680 = arith.addi %0, %c2_i32_263 : i32
    %681 = arith.index_cast %680 : i32 to index
    %c20_264 = arith.constant 20 : index
    %682 = memref.load %arg1[%681, %c20_264] : memref<4x32xf32, #tpu.memory_space<smem>>
    %683 = arith.mulf %682, %517 : f32
    %684 = vector.broadcast %683 : f32 to vector<8x128xf32>
    %685 = arith.mulf %684, %679 : vector<8x128xf32>
    %686 = arith.addf %656, %685 : vector<8x128xf32>
    %c2_i32_265 = arith.constant 2 : i32
    %687 = arith.addi %0, %c2_i32_265 : i32
    %688 = arith.index_cast %687 : i32 to index
    %c21_266 = arith.constant 21 : index
    %689 = memref.load %arg1[%688, %c21_266] : memref<4x32xf32, #tpu.memory_space<smem>>
    %690 = arith.mulf %689, %520 : f32
    %691 = vector.broadcast %690 : f32 to vector<8x128xf32>
    %692 = arith.mulf %691, %679 : vector<8x128xf32>
    %693 = arith.addf %663, %692 : vector<8x128xf32>
    %c2_i32_267 = arith.constant 2 : i32
    %694 = arith.addi %0, %c2_i32_267 : i32
    %695 = arith.index_cast %694 : i32 to index
    %c22_268 = arith.constant 22 : index
    %696 = memref.load %arg1[%695, %c22_268] : memref<4x32xf32, #tpu.memory_space<smem>>
    %697 = arith.mulf %696, %523 : f32
    %698 = vector.broadcast %697 : f32 to vector<8x128xf32>
    %699 = arith.mulf %698, %679 : vector<8x128xf32>
    %700 = arith.addf %670, %699 : vector<8x128xf32>
    %c2_i32_269 = arith.constant 2 : i32
    %701 = arith.addi %0, %c2_i32_269 : i32
    %702 = arith.index_cast %701 : i32 to index
    %c23_270 = arith.constant 23 : index
    %703 = memref.load %arg1[%702, %c23_270] : memref<4x32xf32, #tpu.memory_space<smem>>
    %704 = arith.mulf %703, %523 : f32
    %705 = vector.broadcast %704 : f32 to vector<8x128xf32>
    %706 = arith.mulf %705, %679 : vector<8x128xf32>
    %707 = arith.addf %677, %706 : vector<8x128xf32>
    %c2_271 = arith.constant 2 : index
    %c6_272 = arith.constant 6 : index
    %c0_273 = arith.constant 0 : index
    %c0_274 = arith.constant 0 : index
    %708 = vector.load %arg3[%c2_271, %c6_272, %c0_273, %c0_274] : memref<4x8x8x128xf32, #tpu.memory_space<vmem>>, vector<1x1x8x128xf32>
    %709 = vector.shape_cast %708 : vector<1x1x8x128xf32> to vector<8x128xf32>
    %c2_i32_275 = arith.constant 2 : i32
    %710 = arith.addi %0, %c2_i32_275 : i32
    %711 = arith.index_cast %710 : i32 to index
    %c24_276 = arith.constant 24 : index
    %712 = memref.load %arg1[%711, %c24_276] : memref<4x32xf32, #tpu.memory_space<smem>>
    %713 = arith.mulf %712, %517 : f32
    %714 = vector.broadcast %713 : f32 to vector<8x128xf32>
    %715 = arith.mulf %714, %709 : vector<8x128xf32>
    %716 = arith.addf %686, %715 : vector<8x128xf32>
    %c2_i32_277 = arith.constant 2 : i32
    %717 = arith.addi %0, %c2_i32_277 : i32
    %718 = arith.index_cast %717 : i32 to index
    %c25_278 = arith.constant 25 : index
    %719 = memref.load %arg1[%718, %c25_278] : memref<4x32xf32, #tpu.memory_space<smem>>
    %720 = arith.mulf %719, %520 : f32
    %721 = vector.broadcast %720 : f32 to vector<8x128xf32>
    %722 = arith.mulf %721, %709 : vector<8x128xf32>
    %723 = arith.addf %693, %722 : vector<8x128xf32>
    %c2_i32_279 = arith.constant 2 : i32
    %724 = arith.addi %0, %c2_i32_279 : i32
    %725 = arith.index_cast %724 : i32 to index
    %c26_280 = arith.constant 26 : index
    %726 = memref.load %arg1[%725, %c26_280] : memref<4x32xf32, #tpu.memory_space<smem>>
    %727 = arith.mulf %726, %523 : f32
    %728 = vector.broadcast %727 : f32 to vector<8x128xf32>
    %729 = arith.mulf %728, %709 : vector<8x128xf32>
    %730 = arith.addf %700, %729 : vector<8x128xf32>
    %c2_i32_281 = arith.constant 2 : i32
    %731 = arith.addi %0, %c2_i32_281 : i32
    %732 = arith.index_cast %731 : i32 to index
    %c27_282 = arith.constant 27 : index
    %733 = memref.load %arg1[%732, %c27_282] : memref<4x32xf32, #tpu.memory_space<smem>>
    %734 = arith.mulf %733, %523 : f32
    %735 = vector.broadcast %734 : f32 to vector<8x128xf32>
    %736 = arith.mulf %735, %709 : vector<8x128xf32>
    %737 = arith.addf %707, %736 : vector<8x128xf32>
    %c2_283 = arith.constant 2 : index
    %c7_284 = arith.constant 7 : index
    %c0_285 = arith.constant 0 : index
    %c0_286 = arith.constant 0 : index
    %738 = vector.load %arg3[%c2_283, %c7_284, %c0_285, %c0_286] : memref<4x8x8x128xf32, #tpu.memory_space<vmem>>, vector<1x1x8x128xf32>
    %739 = vector.shape_cast %738 : vector<1x1x8x128xf32> to vector<8x128xf32>
    %c2_i32_287 = arith.constant 2 : i32
    %740 = arith.addi %0, %c2_i32_287 : i32
    %741 = arith.index_cast %740 : i32 to index
    %c28_288 = arith.constant 28 : index
    %742 = memref.load %arg1[%741, %c28_288] : memref<4x32xf32, #tpu.memory_space<smem>>
    %743 = arith.mulf %742, %517 : f32
    %744 = vector.broadcast %743 : f32 to vector<8x128xf32>
    %745 = arith.mulf %744, %739 : vector<8x128xf32>
    %746 = arith.addf %716, %745 : vector<8x128xf32>
    %c2_i32_289 = arith.constant 2 : i32
    %747 = arith.addi %0, %c2_i32_289 : i32
    %748 = arith.index_cast %747 : i32 to index
    %c29_290 = arith.constant 29 : index
    %749 = memref.load %arg1[%748, %c29_290] : memref<4x32xf32, #tpu.memory_space<smem>>
    %750 = arith.mulf %749, %520 : f32
    %751 = vector.broadcast %750 : f32 to vector<8x128xf32>
    %752 = arith.mulf %751, %739 : vector<8x128xf32>
    %753 = arith.addf %723, %752 : vector<8x128xf32>
    %c2_i32_291 = arith.constant 2 : i32
    %754 = arith.addi %0, %c2_i32_291 : i32
    %755 = arith.index_cast %754 : i32 to index
    %c30_292 = arith.constant 30 : index
    %756 = memref.load %arg1[%755, %c30_292] : memref<4x32xf32, #tpu.memory_space<smem>>
    %757 = arith.mulf %756, %523 : f32
    %758 = vector.broadcast %757 : f32 to vector<8x128xf32>
    %759 = arith.mulf %758, %739 : vector<8x128xf32>
    %760 = arith.addf %730, %759 : vector<8x128xf32>
    %c2_i32_293 = arith.constant 2 : i32
    %761 = arith.addi %0, %c2_i32_293 : i32
    %762 = arith.index_cast %761 : i32 to index
    %c31_294 = arith.constant 31 : index
    %763 = memref.load %arg1[%762, %c31_294] : memref<4x32xf32, #tpu.memory_space<smem>>
    %764 = arith.mulf %763, %523 : f32
    %765 = vector.broadcast %764 : f32 to vector<8x128xf32>
    %766 = arith.mulf %765, %739 : vector<8x128xf32>
    %767 = arith.addf %737, %766 : vector<8x128xf32>
    %c16_295 = arith.constant 16 : index
    %c0_296 = arith.constant 0 : index
    %768 = vector.load %arg8[%c16_295, %c0_296] : memref<32x512xf32, #tpu.memory_space<vmem>>, vector<8x128xf32>
    tpu.vector_store %arg8[%c16_295, %c0_296], %746 {strides = array<i32>} : memref<32x512xf32, #tpu.memory_space<vmem>>, vector<8x128xf32>,
    %c16_297 = arith.constant 16 : index
    %c128_298 = arith.constant 128 : index
    %769 = vector.load %arg8[%c16_297, %c128_298] : memref<32x512xf32, #tpu.memory_space<vmem>>, vector<8x128xf32>
    tpu.vector_store %arg8[%c16_297, %c128_298], %753 {strides = array<i32>} : memref<32x512xf32, #tpu.memory_space<vmem>>, vector<8x128xf32>,
    %c16_299 = arith.constant 16 : index
    %c256_300 = arith.constant 256 : index
    %770 = vector.load %arg8[%c16_299, %c256_300] : memref<32x512xf32, #tpu.memory_space<vmem>>, vector<8x128xf32>
    tpu.vector_store %arg8[%c16_299, %c256_300], %760 {strides = array<i32>} : memref<32x512xf32, #tpu.memory_space<vmem>>, vector<8x128xf32>,
    %c16_301 = arith.constant 16 : index
    %c384_302 = arith.constant 384 : index
    %771 = vector.load %arg8[%c16_301, %c384_302] : memref<32x512xf32, #tpu.memory_space<vmem>>, vector<8x128xf32>
    tpu.vector_store %arg8[%c16_301, %c384_302], %767 {strides = array<i32>} : memref<32x512xf32, #tpu.memory_space<vmem>>, vector<8x128xf32>,
    %c3_i32 = arith.constant 3 : i32
    %772 = arith.addi %0, %c3_i32 : i32
    %773 = arith.index_cast %772 : i32 to index
    %c0_303 = arith.constant 0 : index
    %774 = memref.load %arg2[%773, %c0_303] : memref<4x3xf32, #tpu.memory_space<smem>>
    %c3_i32_304 = arith.constant 3 : i32
    %775 = arith.addi %0, %c3_i32_304 : i32
    %776 = arith.index_cast %775 : i32 to index
    %c1_305 = arith.constant 1 : index
    %777 = memref.load %arg2[%776, %c1_305] : memref<4x3xf32, #tpu.memory_space<smem>>
    %c3_i32_306 = arith.constant 3 : i32
    %778 = arith.addi %0, %c3_i32_306 : i32
    %779 = arith.index_cast %778 : i32 to index
    %c2_307 = arith.constant 2 : index
    %780 = memref.load %arg2[%779, %c2_307] : memref<4x3xf32, #tpu.memory_space<smem>>
    %cst_308 = arith.constant 0.000000e+00 : f32
    %781 = vector.broadcast %cst_308 : f32 to vector<8x128xf32>
    %cst_309 = arith.constant 0.000000e+00 : f32
    %782 = vector.broadcast %cst_309 : f32 to vector<8x128xf32>
    %cst_310 = arith.constant 0.000000e+00 : f32
    %783 = vector.broadcast %cst_310 : f32 to vector<8x128xf32>
    %cst_311 = arith.constant 0.000000e+00 : f32
    %784 = vector.broadcast %cst_311 : f32 to vector<8x128xf32>
    %c3_312 = arith.constant 3 : index
    %c0_313 = arith.constant 0 : index
    %c0_314 = arith.constant 0 : index
    %c0_315 = arith.constant 0 : index
    %785 = vector.load %arg3[%c3_312, %c0_313, %c0_314, %c0_315] : memref<4x8x8x128xf32, #tpu.memory_space<vmem>>, vector<1x1x8x128xf32>
    %786 = vector.shape_cast %785 : vector<1x1x8x128xf32> to vector<8x128xf32>
    %c3_i32_316 = arith.constant 3 : i32
    %787 = arith.addi %0, %c3_i32_316 : i32
    %788 = arith.index_cast %787 : i32 to index
    %c0_317 = arith.constant 0 : index
    %789 = memref.load %arg1[%788, %c0_317] : memref<4x32xf32, #tpu.memory_space<smem>>
    %790 = arith.mulf %789, %774 : f32
    %791 = vector.broadcast %790 : f32 to vector<8x128xf32>
    %792 = arith.mulf %791, %786 : vector<8x128xf32>
    %793 = arith.addf %781, %792 : vector<8x128xf32>
    %c3_i32_318 = arith.constant 3 : i32
    %794 = arith.addi %0, %c3_i32_318 : i32
    %795 = arith.index_cast %794 : i32 to index
    %c1_319 = arith.constant 1 : index
    %796 = memref.load %arg1[%795, %c1_319] : memref<4x32xf32, #tpu.memory_space<smem>>
    %797 = arith.mulf %796, %777 : f32
    %798 = vector.broadcast %797 : f32 to vector<8x128xf32>
    %799 = arith.mulf %798, %786 : vector<8x128xf32>
    %800 = arith.addf %782, %799 : vector<8x128xf32>
    %c3_i32_320 = arith.constant 3 : i32
    %801 = arith.addi %0, %c3_i32_320 : i32
    %802 = arith.index_cast %801 : i32 to index
    %c2_321 = arith.constant 2 : index
    %803 = memref.load %arg1[%802, %c2_321] : memref<4x32xf32, #tpu.memory_space<smem>>
    %804 = arith.mulf %803, %780 : f32
    %805 = vector.broadcast %804 : f32 to vector<8x128xf32>
    %806 = arith.mulf %805, %786 : vector<8x128xf32>
    %807 = arith.addf %783, %806 : vector<8x128xf32>
    %c3_i32_322 = arith.constant 3 : i32
    %808 = arith.addi %0, %c3_i32_322 : i32
    %809 = arith.index_cast %808 : i32 to index
    %c3_323 = arith.constant 3 : index
    %810 = memref.load %arg1[%809, %c3_323] : memref<4x32xf32, #tpu.memory_space<smem>>
    %811 = arith.mulf %810, %780 : f32
    %812 = vector.broadcast %811 : f32 to vector<8x128xf32>
    %813 = arith.mulf %812, %786 : vector<8x128xf32>
    %814 = arith.addf %784, %813 : vector<8x128xf32>
    %c3_324 = arith.constant 3 : index
    %c1_325 = arith.constant 1 : index
    %c0_326 = arith.constant 0 : index
    %c0_327 = arith.constant 0 : index
    %815 = vector.load %arg3[%c3_324, %c1_325, %c0_326, %c0_327] : memref<4x8x8x128xf32, #tpu.memory_space<vmem>>, vector<1x1x8x128xf32>
    %816 = vector.shape_cast %815 : vector<1x1x8x128xf32> to vector<8x128xf32>
    %c3_i32_328 = arith.constant 3 : i32
    %817 = arith.addi %0, %c3_i32_328 : i32
    %818 = arith.index_cast %817 : i32 to index
    %c4_329 = arith.constant 4 : index
    %819 = memref.load %arg1[%818, %c4_329] : memref<4x32xf32, #tpu.memory_space<smem>>
    %820 = arith.mulf %819, %774 : f32
    %821 = vector.broadcast %820 : f32 to vector<8x128xf32>
    %822 = arith.mulf %821, %816 : vector<8x128xf32>
    %823 = arith.addf %793, %822 : vector<8x128xf32>
    %c3_i32_330 = arith.constant 3 : i32
    %824 = arith.addi %0, %c3_i32_330 : i32
    %825 = arith.index_cast %824 : i32 to index
    %c5_331 = arith.constant 5 : index
    %826 = memref.load %arg1[%825, %c5_331] : memref<4x32xf32, #tpu.memory_space<smem>>
    %827 = arith.mulf %826, %777 : f32
    %828 = vector.broadcast %827 : f32 to vector<8x128xf32>
    %829 = arith.mulf %828, %816 : vector<8x128xf32>
    %830 = arith.addf %800, %829 : vector<8x128xf32>
    %c3_i32_332 = arith.constant 3 : i32
    %831 = arith.addi %0, %c3_i32_332 : i32
    %832 = arith.index_cast %831 : i32 to index
    %c6_333 = arith.constant 6 : index
    %833 = memref.load %arg1[%832, %c6_333] : memref<4x32xf32, #tpu.memory_space<smem>>
    %834 = arith.mulf %833, %780 : f32
    %835 = vector.broadcast %834 : f32 to vector<8x128xf32>
    %836 = arith.mulf %835, %816 : vector<8x128xf32>
    %837 = arith.addf %807, %836 : vector<8x128xf32>
    %c3_i32_334 = arith.constant 3 : i32
    %838 = arith.addi %0, %c3_i32_334 : i32
    %839 = arith.index_cast %838 : i32 to index
    %c7_335 = arith.constant 7 : index
    %840 = memref.load %arg1[%839, %c7_335] : memref<4x32xf32, #tpu.memory_space<smem>>
    %841 = arith.mulf %840, %780 : f32
    %842 = vector.broadcast %841 : f32 to vector<8x128xf32>
    %843 = arith.mulf %842, %816 : vector<8x128xf32>
    %844 = arith.addf %814, %843 : vector<8x128xf32>
    %c3_336 = arith.constant 3 : index
    %c2_337 = arith.constant 2 : index
    %c0_338 = arith.constant 0 : index
    %c0_339 = arith.constant 0 : index
    %845 = vector.load %arg3[%c3_336, %c2_337, %c0_338, %c0_339] : memref<4x8x8x128xf32, #tpu.memory_space<vmem>>, vector<1x1x8x128xf32>
    %846 = vector.shape_cast %845 : vector<1x1x8x128xf32> to vector<8x128xf32>
    %c3_i32_340 = arith.constant 3 : i32
    %847 = arith.addi %0, %c3_i32_340 : i32
    %848 = arith.index_cast %847 : i32 to index
    %c8_341 = arith.constant 8 : index
    %849 = memref.load %arg1[%848, %c8_341] : memref<4x32xf32, #tpu.memory_space<smem>>
    %850 = arith.mulf %849, %774 : f32
    %851 = vector.broadcast %850 : f32 to vector<8x128xf32>
    %852 = arith.mulf %851, %846 : vector<8x128xf32>
    %853 = arith.addf %823, %852 : vector<8x128xf32>
    %c3_i32_342 = arith.constant 3 : i32
    %854 = arith.addi %0, %c3_i32_342 : i32
    %855 = arith.index_cast %854 : i32 to index
    %c9_343 = arith.constant 9 : index
    %856 = memref.load %arg1[%855, %c9_343] : memref<4x32xf32, #tpu.memory_space<smem>>
    %857 = arith.mulf %856, %777 : f32
    %858 = vector.broadcast %857 : f32 to vector<8x128xf32>
    %859 = arith.mulf %858, %846 : vector<8x128xf32>
    %860 = arith.addf %830, %859 : vector<8x128xf32>
    %c3_i32_344 = arith.constant 3 : i32
    %861 = arith.addi %0, %c3_i32_344 : i32
    %862 = arith.index_cast %861 : i32 to index
    %c10_345 = arith.constant 10 : index
    %863 = memref.load %arg1[%862, %c10_345] : memref<4x32xf32, #tpu.memory_space<smem>>
    %864 = arith.mulf %863, %780 : f32
    %865 = vector.broadcast %864 : f32 to vector<8x128xf32>
    %866 = arith.mulf %865, %846 : vector<8x128xf32>
    %867 = arith.addf %837, %866 : vector<8x128xf32>
    %c3_i32_346 = arith.constant 3 : i32
    %868 = arith.addi %0, %c3_i32_346 : i32
    %869 = arith.index_cast %868 : i32 to index
    %c11_347 = arith.constant 11 : index
    %870 = memref.load %arg1[%869, %c11_347] : memref<4x32xf32, #tpu.memory_space<smem>>
    %871 = arith.mulf %870, %780 : f32
    %872 = vector.broadcast %871 : f32 to vector<8x128xf32>
    %873 = arith.mulf %872, %846 : vector<8x128xf32>
    %874 = arith.addf %844, %873 : vector<8x128xf32>
    %c3_348 = arith.constant 3 : index
    %c3_349 = arith.constant 3 : index
    %c0_350 = arith.constant 0 : index
    %c0_351 = arith.constant 0 : index
    %875 = vector.load %arg3[%c3_348, %c3_349, %c0_350, %c0_351] : memref<4x8x8x128xf32, #tpu.memory_space<vmem>>, vector<1x1x8x128xf32>
    %876 = vector.shape_cast %875 : vector<1x1x8x128xf32> to vector<8x128xf32>
    %c3_i32_352 = arith.constant 3 : i32
    %877 = arith.addi %0, %c3_i32_352 : i32
    %878 = arith.index_cast %877 : i32 to index
    %c12_353 = arith.constant 12 : index
    %879 = memref.load %arg1[%878, %c12_353] : memref<4x32xf32, #tpu.memory_space<smem>>
    %880 = arith.mulf %879, %774 : f32
    %881 = vector.broadcast %880 : f32 to vector<8x128xf32>
    %882 = arith.mulf %881, %876 : vector<8x128xf32>
    %883 = arith.addf %853, %882 : vector<8x128xf32>
    %c3_i32_354 = arith.constant 3 : i32
    %884 = arith.addi %0, %c3_i32_354 : i32
    %885 = arith.index_cast %884 : i32 to index
    %c13_355 = arith.constant 13 : index
    %886 = memref.load %arg1[%885, %c13_355] : memref<4x32xf32, #tpu.memory_space<smem>>
    %887 = arith.mulf %886, %777 : f32
    %888 = vector.broadcast %887 : f32 to vector<8x128xf32>
    %889 = arith.mulf %888, %876 : vector<8x128xf32>
    %890 = arith.addf %860, %889 : vector<8x128xf32>
    %c3_i32_356 = arith.constant 3 : i32
    %891 = arith.addi %0, %c3_i32_356 : i32
    %892 = arith.index_cast %891 : i32 to index
    %c14_357 = arith.constant 14 : index
    %893 = memref.load %arg1[%892, %c14_357] : memref<4x32xf32, #tpu.memory_space<smem>>
    %894 = arith.mulf %893, %780 : f32
    %895 = vector.broadcast %894 : f32 to vector<8x128xf32>
    %896 = arith.mulf %895, %876 : vector<8x128xf32>
    %897 = arith.addf %867, %896 : vector<8x128xf32>
    %c3_i32_358 = arith.constant 3 : i32
    %898 = arith.addi %0, %c3_i32_358 : i32
    %899 = arith.index_cast %898 : i32 to index
    %c15_359 = arith.constant 15 : index
    %900 = memref.load %arg1[%899, %c15_359] : memref<4x32xf32, #tpu.memory_space<smem>>
    %901 = arith.mulf %900, %780 : f32
    %902 = vector.broadcast %901 : f32 to vector<8x128xf32>
    %903 = arith.mulf %902, %876 : vector<8x128xf32>
    %904 = arith.addf %874, %903 : vector<8x128xf32>
    %c3_360 = arith.constant 3 : index
    %c4_361 = arith.constant 4 : index
    %c0_362 = arith.constant 0 : index
    %c0_363 = arith.constant 0 : index
    %905 = vector.load %arg3[%c3_360, %c4_361, %c0_362, %c0_363] : memref<4x8x8x128xf32, #tpu.memory_space<vmem>>, vector<1x1x8x128xf32>
    %906 = vector.shape_cast %905 : vector<1x1x8x128xf32> to vector<8x128xf32>
    %c3_i32_364 = arith.constant 3 : i32
    %907 = arith.addi %0, %c3_i32_364 : i32
    %908 = arith.index_cast %907 : i32 to index
    %c16_365 = arith.constant 16 : index
    %909 = memref.load %arg1[%908, %c16_365] : memref<4x32xf32, #tpu.memory_space<smem>>
    %910 = arith.mulf %909, %774 : f32
    %911 = vector.broadcast %910 : f32 to vector<8x128xf32>
    %912 = arith.mulf %911, %906 : vector<8x128xf32>
    %913 = arith.addf %883, %912 : vector<8x128xf32>
    %c3_i32_366 = arith.constant 3 : i32
    %914 = arith.addi %0, %c3_i32_366 : i32
    %915 = arith.index_cast %914 : i32 to index
    %c17_367 = arith.constant 17 : index
    %916 = memref.load %arg1[%915, %c17_367] : memref<4x32xf32, #tpu.memory_space<smem>>
    %917 = arith.mulf %916, %777 : f32
    %918 = vector.broadcast %917 : f32 to vector<8x128xf32>
    %919 = arith.mulf %918, %906 : vector<8x128xf32>
    %920 = arith.addf %890, %919 : vector<8x128xf32>
    %c3_i32_368 = arith.constant 3 : i32
    %921 = arith.addi %0, %c3_i32_368 : i32
    %922 = arith.index_cast %921 : i32 to index
    %c18_369 = arith.constant 18 : index
    %923 = memref.load %arg1[%922, %c18_369] : memref<4x32xf32, #tpu.memory_space<smem>>
    %924 = arith.mulf %923, %780 : f32
    %925 = vector.broadcast %924 : f32 to vector<8x128xf32>
    %926 = arith.mulf %925, %906 : vector<8x128xf32>
    %927 = arith.addf %897, %926 : vector<8x128xf32>
    %c3_i32_370 = arith.constant 3 : i32
    %928 = arith.addi %0, %c3_i32_370 : i32
    %929 = arith.index_cast %928 : i32 to index
    %c19_371 = arith.constant 19 : index
    %930 = memref.load %arg1[%929, %c19_371] : memref<4x32xf32, #tpu.memory_space<smem>>
    %931 = arith.mulf %930, %780 : f32
    %932 = vector.broadcast %931 : f32 to vector<8x128xf32>
    %933 = arith.mulf %932, %906 : vector<8x128xf32>
    %934 = arith.addf %904, %933 : vector<8x128xf32>
    %c3_372 = arith.constant 3 : index
    %c5_373 = arith.constant 5 : index
    %c0_374 = arith.constant 0 : index
    %c0_375 = arith.constant 0 : index
    %935 = vector.load %arg3[%c3_372, %c5_373, %c0_374, %c0_375] : memref<4x8x8x128xf32, #tpu.memory_space<vmem>>, vector<1x1x8x128xf32>
    %936 = vector.shape_cast %935 : vector<1x1x8x128xf32> to vector<8x128xf32>
    %c3_i32_376 = arith.constant 3 : i32
    %937 = arith.addi %0, %c3_i32_376 : i32
    %938 = arith.index_cast %937 : i32 to index
    %c20_377 = arith.constant 20 : index
    %939 = memref.load %arg1[%938, %c20_377] : memref<4x32xf32, #tpu.memory_space<smem>>
    %940 = arith.mulf %939, %774 : f32
    %941 = vector.broadcast %940 : f32 to vector<8x128xf32>
    %942 = arith.mulf %941, %936 : vector<8x128xf32>
    %943 = arith.addf %913, %942 : vector<8x128xf32>
    %c3_i32_378 = arith.constant 3 : i32
    %944 = arith.addi %0, %c3_i32_378 : i32
    %945 = arith.index_cast %944 : i32 to index
    %c21_379 = arith.constant 21 : index
    %946 = memref.load %arg1[%945, %c21_379] : memref<4x32xf32, #tpu.memory_space<smem>>
    %947 = arith.mulf %946, %777 : f32
    %948 = vector.broadcast %947 : f32 to vector<8x128xf32>
    %949 = arith.mulf %948, %936 : vector<8x128xf32>
    %950 = arith.addf %920, %949 : vector<8x128xf32>
    %c3_i32_380 = arith.constant 3 : i32
    %951 = arith.addi %0, %c3_i32_380 : i32
    %952 = arith.index_cast %951 : i32 to index
    %c22_381 = arith.constant 22 : index
    %953 = memref.load %arg1[%952, %c22_381] : memref<4x32xf32, #tpu.memory_space<smem>>
    %954 = arith.mulf %953, %780 : f32
    %955 = vector.broadcast %954 : f32 to vector<8x128xf32>
    %956 = arith.mulf %955, %936 : vector<8x128xf32>
    %957 = arith.addf %927, %956 : vector<8x128xf32>
    %c3_i32_382 = arith.constant 3 : i32
    %958 = arith.addi %0, %c3_i32_382 : i32
    %959 = arith.index_cast %958 : i32 to index
    %c23_383 = arith.constant 23 : index
    %960 = memref.load %arg1[%959, %c23_383] : memref<4x32xf32, #tpu.memory_space<smem>>
    %961 = arith.mulf %960, %780 : f32
    %962 = vector.broadcast %961 : f32 to vector<8x128xf32>
    %963 = arith.mulf %962, %936 : vector<8x128xf32>
    %964 = arith.addf %934, %963 : vector<8x128xf32>
    %c3_384 = arith.constant 3 : index
    %c6_385 = arith.constant 6 : index
    %c0_386 = arith.constant 0 : index
    %c0_387 = arith.constant 0 : index
    %965 = vector.load %arg3[%c3_384, %c6_385, %c0_386, %c0_387] : memref<4x8x8x128xf32, #tpu.memory_space<vmem>>, vector<1x1x8x128xf32>
    %966 = vector.shape_cast %965 : vector<1x1x8x128xf32> to vector<8x128xf32>
    %c3_i32_388 = arith.constant 3 : i32
    %967 = arith.addi %0, %c3_i32_388 : i32
    %968 = arith.index_cast %967 : i32 to index
    %c24_389 = arith.constant 24 : index
    %969 = memref.load %arg1[%968, %c24_389] : memref<4x32xf32, #tpu.memory_space<smem>>
    %970 = arith.mulf %969, %774 : f32
    %971 = vector.broadcast %970 : f32 to vector<8x128xf32>
    %972 = arith.mulf %971, %966 : vector<8x128xf32>
    %973 = arith.addf %943, %972 : vector<8x128xf32>
    %c3_i32_390 = arith.constant 3 : i32
    %974 = arith.addi %0, %c3_i32_390 : i32
    %975 = arith.index_cast %974 : i32 to index
    %c25_391 = arith.constant 25 : index
    %976 = memref.load %arg1[%975, %c25_391] : memref<4x32xf32, #tpu.memory_space<smem>>
    %977 = arith.mulf %976, %777 : f32
    %978 = vector.broadcast %977 : f32 to vector<8x128xf32>
    %979 = arith.mulf %978, %966 : vector<8x128xf32>
    %980 = arith.addf %950, %979 : vector<8x128xf32>
    %c3_i32_392 = arith.constant 3 : i32
    %981 = arith.addi %0, %c3_i32_392 : i32
    %982 = arith.index_cast %981 : i32 to index
    %c26_393 = arith.constant 26 : index
    %983 = memref.load %arg1[%982, %c26_393] : memref<4x32xf32, #tpu.memory_space<smem>>
    %984 = arith.mulf %983, %780 : f32
    %985 = vector.broadcast %984 : f32 to vector<8x128xf32>
    %986 = arith.mulf %985, %966 : vector<8x128xf32>
    %987 = arith.addf %957, %986 : vector<8x128xf32>
    %c3_i32_394 = arith.constant 3 : i32
    %988 = arith.addi %0, %c3_i32_394 : i32
    %989 = arith.index_cast %988 : i32 to index
    %c27_395 = arith.constant 27 : index
    %990 = memref.load %arg1[%989, %c27_395] : memref<4x32xf32, #tpu.memory_space<smem>>
    %991 = arith.mulf %990, %780 : f32
    %992 = vector.broadcast %991 : f32 to vector<8x128xf32>
    %993 = arith.mulf %992, %966 : vector<8x128xf32>
    %994 = arith.addf %964, %993 : vector<8x128xf32>
    %c3_396 = arith.constant 3 : index
    %c7_397 = arith.constant 7 : index
    %c0_398 = arith.constant 0 : index
    %c0_399 = arith.constant 0 : index
    %995 = vector.load %arg3[%c3_396, %c7_397, %c0_398, %c0_399] : memref<4x8x8x128xf32, #tpu.memory_space<vmem>>, vector<1x1x8x128xf32>
    %996 = vector.shape_cast %995 : vector<1x1x8x128xf32> to vector<8x128xf32>
    %c3_i32_400 = arith.constant 3 : i32
    %997 = arith.addi %0, %c3_i32_400 : i32
    %998 = arith.index_cast %997 : i32 to index
    %c28_401 = arith.constant 28 : index
    %999 = memref.load %arg1[%998, %c28_401] : memref<4x32xf32, #tpu.memory_space<smem>>
    %1000 = arith.mulf %999, %774 : f32
    %1001 = vector.broadcast %1000 : f32 to vector<8x128xf32>
    %1002 = arith.mulf %1001, %996 : vector<8x128xf32>
    %1003 = arith.addf %973, %1002 : vector<8x128xf32>
    %c3_i32_402 = arith.constant 3 : i32
    %1004 = arith.addi %0, %c3_i32_402 : i32
    %1005 = arith.index_cast %1004 : i32 to index
    %c29_403 = arith.constant 29 : index
    %1006 = memref.load %arg1[%1005, %c29_403] : memref<4x32xf32, #tpu.memory_space<smem>>
    %1007 = arith.mulf %1006, %777 : f32
    %1008 = vector.broadcast %1007 : f32 to vector<8x128xf32>
    %1009 = arith.mulf %1008, %996 : vector<8x128xf32>
    %1010 = arith.addf %980, %1009 : vector<8x128xf32>
    %c3_i32_404 = arith.constant 3 : i32
    %1011 = arith.addi %0, %c3_i32_404 : i32
    %1012 = arith.index_cast %1011 : i32 to index
    %c30_405 = arith.constant 30 : index
    %1013 = memref.load %arg1[%1012, %c30_405] : memref<4x32xf32, #tpu.memory_space<smem>>
    %1014 = arith.mulf %1013, %780 : f32
    %1015 = vector.broadcast %1014 : f32 to vector<8x128xf32>
    %1016 = arith.mulf %1015, %996 : vector<8x128xf32>
    %1017 = arith.addf %987, %1016 : vector<8x128xf32>
    %c3_i32_406 = arith.constant 3 : i32
    %1018 = arith.addi %0, %c3_i32_406 : i32
    %1019 = arith.index_cast %1018 : i32 to index
    %c31_407 = arith.constant 31 : index
    %1020 = memref.load %arg1[%1019, %c31_407] : memref<4x32xf32, #tpu.memory_space<smem>>
    %1021 = arith.mulf %1020, %780 : f32
    %1022 = vector.broadcast %1021 : f32 to vector<8x128xf32>
    %1023 = arith.mulf %1022, %996 : vector<8x128xf32>
    %1024 = arith.addf %994, %1023 : vector<8x128xf32>
    %c24_408 = arith.constant 24 : index
    %c0_409 = arith.constant 0 : index
    %1025 = vector.load %arg8[%c24_408, %c0_409] : memref<32x512xf32, #tpu.memory_space<vmem>>, vector<8x128xf32>
    tpu.vector_store %arg8[%c24_408, %c0_409], %1003 {strides = array<i32>} : memref<32x512xf32, #tpu.memory_space<vmem>>, vector<8x128xf32>,
    %c24_410 = arith.constant 24 : index
    %c128_411 = arith.constant 128 : index
    %1026 = vector.load %arg8[%c24_410, %c128_411] : memref<32x512xf32, #tpu.memory_space<vmem>>, vector<8x128xf32>
    tpu.vector_store %arg8[%c24_410, %c128_411], %1010 {strides = array<i32>} : memref<32x512xf32, #tpu.memory_space<vmem>>, vector<8x128xf32>,
    %c24_412 = arith.constant 24 : index
    %c256_413 = arith.constant 256 : index
    %1027 = vector.load %arg8[%c24_412, %c256_413] : memref<32x512xf32, #tpu.memory_space<vmem>>, vector<8x128xf32>
    tpu.vector_store %arg8[%c24_412, %c256_413], %1017 {strides = array<i32>} : memref<32x512xf32, #tpu.memory_space<vmem>>, vector<8x128xf32>,
    %c24_414 = arith.constant 24 : index
    %c384_415 = arith.constant 384 : index
    %1028 = vector.load %arg8[%c24_414, %c384_415] : memref<32x512xf32, #tpu.memory_space<vmem>>, vector<8x128xf32>
    tpu.vector_store %arg8[%c24_414, %c384_415], %1024 {strides = array<i32>} : memref<32x512xf32, #tpu.memory_space<vmem>>, vector<8x128xf32>,
    %c0_416 = arith.constant 0 : index
    %c0_417 = arith.constant 0 : index
    %1029 = vector.load %arg8[%c0_416, %c0_417] : memref<32x512xf32, #tpu.memory_space<vmem>>, vector<32x512xf32>
    %c0_418 = arith.constant 0 : index
    %c0_419 = arith.constant 0 : index
    %1030 = vector.load %arg5[%c0_418, %c0_419] : memref<512x128xf32, #tpu.memory_space<vmem>>, vector<512x128xf32>
    %cst_420 = arith.constant dense<0.000000e+00> : vector<32x128xf32>
    %1031 = tpu.matmul %1029, %1030, %cst_420 {dimension_numbers = #tpu.dot_dimension_numbers<[1], [0], [0], [1], [0, 0, 1, 1], [], []>} : vector<32x512xf32>, vector<512x128xf32>, vector<32x128xf32> -> vector<32x128xf32>
    %c0_421 = arith.constant 0 : index
    %c0_422 = arith.constant 0 : index
    %1032 = vector.load %arg6[%c0_421, %c0_422] : memref<1x128xf32, #tpu.memory_space<vmem>>, vector<1x128xf32>
    %c0_i32_423 = arith.constant 0 : i32
    %1033 = arith.addi %0, %c0_i32_423 : i32
    %1034 = arith.index_cast %1033 : i32 to index
    %c2_424 = arith.constant 2 : index
    %1035 = memref.load %arg2[%1034, %c2_424] : memref<4x3xf32, #tpu.memory_space<smem>>
    %c0_425 = arith.constant 0 : index
    %c0_426 = arith.constant 0 : index
    %c0_427 = arith.constant 0 : index
    %1036 = vector.load %arg4[%c0_425, %c0_426, %c0_427] : memref<4x8x1xf32, #tpu.memory_space<vmem>>, vector<1x8x1xf32>
    %1037 = vector.shape_cast %1036 : vector<1x8x1xf32> to vector<8x1xf32>
    %1038 = vector.broadcast %1035 : f32 to vector<8x1xf32>
    %1039 = arith.mulf %1038, %1037 : vector<8x1xf32>
    %1040 = vector.broadcast %1039 : vector<8x1xf32> to vector<8x128xf32>
    %1041 = vector.broadcast %1032 : vector<1x128xf32> to vector<8x128xf32>
    %1042 = arith.mulf %1040, %1041 : vector<8x128xf32>
    %1043 = vector.extract_strided_slice %1031 {offsets = [0, 0], sizes = [8, 128], strides = [1, 1]} : vector<32x128xf32> to vector<8x128xf32>
    %1044 = arith.addf %1043, %1042 : vector<8x128xf32>
    %c0_428 = arith.constant 0 : index
    %c0_429 = arith.constant 0 : index
    %c0_430 = arith.constant 0 : index
    %1045 = vector.load %arg7[%c0_428, %c0_429, %c0_430] : memref<4x8x128xf32, #tpu.memory_space<vmem>>, vector<1x8x128xf32>
    %1046 = vector.shape_cast %1045 : vector<1x8x128xf32> to vector<8x128xf32>
    %1047 = vector.shape_cast %1044 : vector<8x128xf32> to vector<1x8x128xf32>
    tpu.vector_store %arg7[%c0_428, %c0_429, %c0_430], %1047 {strides = array<i32>} : memref<4x8x128xf32, #tpu.memory_space<vmem>>, vector<1x8x128xf32>,
    %c1_i32_431 = arith.constant 1 : i32
    %1048 = arith.addi %0, %c1_i32_431 : i32
    %1049 = arith.index_cast %1048 : i32 to index
    %c2_432 = arith.constant 2 : index
    %1050 = memref.load %arg2[%1049, %c2_432] : memref<4x3xf32, #tpu.memory_space<smem>>
    %c1_433 = arith.constant 1 : index
    %c0_434 = arith.constant 0 : index
    %c0_435 = arith.constant 0 : index
    %1051 = vector.load %arg4[%c1_433, %c0_434, %c0_435] : memref<4x8x1xf32, #tpu.memory_space<vmem>>, vector<1x8x1xf32>
    %1052 = vector.shape_cast %1051 : vector<1x8x1xf32> to vector<8x1xf32>
    %1053 = vector.broadcast %1050 : f32 to vector<8x1xf32>
    %1054 = arith.mulf %1053, %1052 : vector<8x1xf32>
    %1055 = vector.broadcast %1054 : vector<8x1xf32> to vector<8x128xf32>
    %1056 = vector.broadcast %1032 : vector<1x128xf32> to vector<8x128xf32>
    %1057 = arith.mulf %1055, %1056 : vector<8x128xf32>
    %1058 = vector.extract_strided_slice %1031 {offsets = [8, 0], sizes = [8, 128], strides = [1, 1]} : vector<32x128xf32> to vector<8x128xf32>
    %1059 = arith.addf %1058, %1057 : vector<8x128xf32>
    %c1_436 = arith.constant 1 : index
    %c0_437 = arith.constant 0 : index
    %c0_438 = arith.constant 0 : index
    %1060 = vector.load %arg7[%c1_436, %c0_437, %c0_438] : memref<4x8x128xf32, #tpu.memory_space<vmem>>, vector<1x8x128xf32>
    %1061 = vector.shape_cast %1060 : vector<1x8x128xf32> to vector<8x128xf32>
    %1062 = vector.shape_cast %1059 : vector<8x128xf32> to vector<1x8x128xf32>
    tpu.vector_store %arg7[%c1_436, %c0_437, %c0_438], %1062 {strides = array<i32>} : memref<4x8x128xf32, #tpu.memory_space<vmem>>, vector<1x8x128xf32>,
    %c2_i32_439 = arith.constant 2 : i32
    %1063 = arith.addi %0, %c2_i32_439 : i32
    %1064 = arith.index_cast %1063 : i32 to index
    %c2_440 = arith.constant 2 : index
    %1065 = memref.load %arg2[%1064, %c2_440] : memref<4x3xf32, #tpu.memory_space<smem>>
    %c2_441 = arith.constant 2 : index
    %c0_442 = arith.constant 0 : index
    %c0_443 = arith.constant 0 : index
    %1066 = vector.load %arg4[%c2_441, %c0_442, %c0_443] : memref<4x8x1xf32, #tpu.memory_space<vmem>>, vector<1x8x1xf32>
    %1067 = vector.shape_cast %1066 : vector<1x8x1xf32> to vector<8x1xf32>
    %1068 = vector.broadcast %1065 : f32 to vector<8x1xf32>
    %1069 = arith.mulf %1068, %1067 : vector<8x1xf32>
    %1070 = vector.broadcast %1069 : vector<8x1xf32> to vector<8x128xf32>
    %1071 = vector.broadcast %1032 : vector<1x128xf32> to vector<8x128xf32>
    %1072 = arith.mulf %1070, %1071 : vector<8x128xf32>
    %1073 = vector.extract_strided_slice %1031 {offsets = [16, 0], sizes = [8, 128], strides = [1, 1]} : vector<32x128xf32> to vector<8x128xf32>
    %1074 = arith.addf %1073, %1072 : vector<8x128xf32>
    %c2_444 = arith.constant 2 : index
    %c0_445 = arith.constant 0 : index
    %c0_446 = arith.constant 0 : index
    %1075 = vector.load %arg7[%c2_444, %c0_445, %c0_446] : memref<4x8x128xf32, #tpu.memory_space<vmem>>, vector<1x8x128xf32>
    %1076 = vector.shape_cast %1075 : vector<1x8x128xf32> to vector<8x128xf32>
    %1077 = vector.shape_cast %1074 : vector<8x128xf32> to vector<1x8x128xf32>
    tpu.vector_store %arg7[%c2_444, %c0_445, %c0_446], %1077 {strides = array<i32>} : memref<4x8x128xf32, #tpu.memory_space<vmem>>, vector<1x8x128xf32>,
    %c3_i32_447 = arith.constant 3 : i32
    %1078 = arith.addi %0, %c3_i32_447 : i32
    %1079 = arith.index_cast %1078 : i32 to index
    %c2_448 = arith.constant 2 : index
    %1080 = memref.load %arg2[%1079, %c2_448] : memref<4x3xf32, #tpu.memory_space<smem>>
    %c3_449 = arith.constant 3 : index
    %c0_450 = arith.constant 0 : index
    %c0_451 = arith.constant 0 : index
    %1081 = vector.load %arg4[%c3_449, %c0_450, %c0_451] : memref<4x8x1xf32, #tpu.memory_space<vmem>>, vector<1x8x1xf32>
    %1082 = vector.shape_cast %1081 : vector<1x8x1xf32> to vector<8x1xf32>
    %1083 = vector.broadcast %1080 : f32 to vector<8x1xf32>
    %1084 = arith.mulf %1083, %1082 : vector<8x1xf32>
    %1085 = vector.broadcast %1084 : vector<8x1xf32> to vector<8x128xf32>
    %1086 = vector.broadcast %1032 : vector<1x128xf32> to vector<8x128xf32>
    %1087 = arith.mulf %1085, %1086 : vector<8x128xf32>
    %1088 = vector.extract_strided_slice %1031 {offsets = [24, 0], sizes = [8, 128], strides = [1, 1]} : vector<32x128xf32> to vector<8x128xf32>
    %1089 = arith.addf %1088, %1087 : vector<8x128xf32>
    %c3_452 = arith.constant 3 : index
    %c0_453 = arith.constant 0 : index
    %c0_454 = arith.constant 0 : index
    %1090 = vector.load %arg7[%c3_452, %c0_453, %c0_454] : memref<4x8x128xf32, #tpu.memory_space<vmem>>, vector<1x8x128xf32>
    %1091 = vector.shape_cast %1090 : vector<1x8x128xf32> to vector<8x128xf32>
    %1092 = vector.shape_cast %1089 : vector<8x128xf32> to vector<1x8x128xf32>
    tpu.vector_store %arg7[%c3_452, %c0_453, %c0_454], %1092 {strides = array<i32>} : memref<4x8x128xf32, #tpu.memory_space<vmem>>, vector<1x8x128xf32>,
    return
  }
  func.func @transform_0(%arg0: i32, %arg1: memref<4x32xf32, #tpu.memory_space<smem>>, %arg2: memref<4x3xf32, #tpu.memory_space<smem>>) -> (i32, i32, i32, i32) {
    %c0_i32 = arith.constant 0 : i32
    %c0_i32_0 = arith.constant 0 : i32
    %c0_i32_1 = arith.constant 0 : i32
    %c0_i32_2 = arith.constant 0 : i32
    return %arg0, %c0_i32, %c0_i32_0, %c0_i32_1 : i32, i32, i32, i32
  }
  func.func @transform_1(%arg0: i32, %arg1: memref<4x32xf32, #tpu.memory_space<smem>>, %arg2: memref<4x3xf32, #tpu.memory_space<smem>>) -> (i32, i32, i32) {
    %c0_i32 = arith.constant 0 : i32
    %c0_i32_0 = arith.constant 0 : i32
    %c0_i32_1 = arith.constant 0 : i32
    return %arg0, %c0_i32, %c0_i32_0 : i32, i32, i32
  }
  func.func @transform_2(%arg0: i32, %arg1: memref<4x32xf32, #tpu.memory_space<smem>>, %arg2: memref<4x3xf32, #tpu.memory_space<smem>>) -> (i32, i32) {
    %c0_i32 = arith.constant 0 : i32
    %c0_i32_0 = arith.constant 0 : i32
    %c0_i32_1 = arith.constant 0 : i32
    return %c0_i32, %c0_i32_0 : i32, i32
  }
  func.func @transform_3(%arg0: i32, %arg1: memref<4x32xf32, #tpu.memory_space<smem>>, %arg2: memref<4x3xf32, #tpu.memory_space<smem>>) -> (i32, i32) {
    %c0_i32 = arith.constant 0 : i32
    %c0_i32_0 = arith.constant 0 : i32
    %c0_i32_1 = arith.constant 0 : i32
    return %c0_i32, %c0_i32_0 : i32, i32
  }
  func.func @transform_4(%arg0: i32, %arg1: memref<4x32xf32, #tpu.memory_space<smem>>, %arg2: memref<4x3xf32, #tpu.memory_space<smem>>) -> (i32, i32, i32) {
    %c0_i32 = arith.constant 0 : i32
    %c0_i32_0 = arith.constant 0 : i32
    %c0_i32_1 = arith.constant 0 : i32
    return %arg0, %c0_i32, %c0_i32_0 : i32, i32, i32
  }
}

</mosaic_0001>

<llo_original>
// kernel: tpu_custom_call.1
$region0: #{tpu_custom_call.1}
  #allocation0 [shape = 'u32[]', space=smem, size = 0x4, offset = 0x4, fixed_abs, tag = 'smem constant byte address 0x4 - core index']
  #allocation1 [shape = 'u32[144,128]{1,0:T(1,128)}', space=vmem, size = 0x12000, scoped, tag = 'internal scratch']
  #allocation2 [shape = 'f32[32,512]{1,0:T(8,128)}', space=vmem, size = 0x10000, scoped, tag = 'scratch operand']
  #allocation3 [shape = 's32[1]{0}', space=sflag, size = 0x4, scoped, tag = 'scoped memory for tpu_custom_call.1']
  #allocation4 [shape = 'u8[2048]{0}', space=smem, size = 0x800, scoped, tag = 'prefetched SMEM operand 0']
  #allocation5 [shape = 'u8[2048]{0}', space=smem, size = 0x800, scoped, tag = 'prefetched SMEM operand 1']
  %s0 = inlined_call_operand.vmem [shape: f32[4,32], index: 0, kind: input, shape index: {}]
  %s1 = inlined_call_operand.vmem [shape: f32[4,3], index: 1, kind: input, shape index: {}]
  %s2 = inlined_call_operand.hbm [shape: f32[4,8,8,128], index: 2, kind: input, shape index: {}]
  %s3 = inlined_call_operand.vmem [shape: f32[4,8,1], index: 3, kind: input, shape index: {}]
  %s4 = inlined_call_operand.hbm [shape: f32[512,128], index: 4, kind: input, shape index: {}]
  %s5 = inlined_call_operand.vmem [shape: f32[1,128], index: 5, kind: input, shape index: {}]
  %s6 = inlined_call_operand.hbm [shape: f32[4,8,128], index: 6, kind: output, shape index: {}]
  %s7 = sld [smem:[#allocation0]]
  $region34: #{tpu_custom_call.1} parent=0
    _
  %s9 = ssub.s32 1, %s7
  %s10 = scalar_select 0, %s9, %s7
  %s11 = sshll.u32 %s0, 4
  %s12 = int_to_ptr.vmem [resolvable:$true] %s11
  %14 = dma.vmem_to_smem %s12, 64, [#allocation4], [#allocation3]
  %s15 = sshll.u32 %s1, 4
  %s16 = int_to_ptr.vmem [resolvable:$true] %s15
  %18 = dma.vmem_to_smem %s16, 64, [#allocation5], [#allocation3]
  %19 = dma.done [#allocation3], 128
  %20 = sfence
  $region1: #{tpu_custom_call.1} parent=0
    #allocation6 [shape = 'u8[131072]{0}', space=vmem, size = 0x20000, scoped, tag = 'input window, operand 2, single buffered']
    #allocation7 [shape = 's32[1]{0}', space=sflag, size = 0x4, scoped, tag = 'scoped memory for tpu_custom_call.1']
    #allocation8 [shape = 's32[1]{0}', space=sflag, size = 0x4, scoped, tag = 'scoped memory for tpu_custom_call.1']
    #allocation9 [shape = 'u8[262144]{0}', space=vmem, size = 0x40000, scoped, tag = 'input window, operand 4, single buffered']
    #allocation10 [shape = 's32[1]{0}', space=sflag, size = 0x4, scoped, tag = 'scoped memory for tpu_custom_call.1']
    #allocation11 [shape = 'u8[16384]{0}', space=vmem, size = 0x4000, scoped, tag = 'output window, operand 0, single buffered']
    %21 = vsyncpa [#allocation7], 0
    %22 = vsyncpa [#allocation10], 0
    %23 = vsyncpa [#allocation8], 0
    // Predicated region
    $region2: #{tpu_custom_call.1} parent=1 // pred_check
      _
    $region3: #{tpu_custom_call.1} parent=1 // pred_check_branch
      %25 = sbr.rel (0) target = $region5
    $region4: #{tpu_custom_call.1} parent=1 // pred_region
      %s27 = ssub.s32 4096, 4096
      %28 = vsyncadd [#allocation7], %s27
      %s29 = sshll.u32 [#allocation6], 4
      %s30 = int_to_ptr.vmem [resolvable:$true] %s29
      %35 = dma.hbm_to_vmem [thread:$0]  %s2, 4096, %s30, [#allocation7], 128, 128, 8
    $region5: #{tpu_custom_call.1} parent=1 // pred_fallthru
      _
    // Predicated region
    $region6: #{tpu_custom_call.1} parent=1 // pred_check
      _
    $region7: #{tpu_custom_call.1} parent=1 // pred_check_branch
      %37 = sbr.rel (0) target = $region9
    $region8: #{tpu_custom_call.1} parent=1 // pred_region
      _
    $region9: #{tpu_custom_call.1} parent=1 // pred_fallthru
      _
    // Predicated region
    $region10: #{tpu_custom_call.1} parent=1 // pred_check
      _
    $region11: #{tpu_custom_call.1} parent=1 // pred_check_branch
      %39 = sbr.rel (0) target = $region13
    $region12: #{tpu_custom_call.1} parent=1 // pred_region
      %s41 = ssub.s32 8192, 8192
      %42 = vsyncadd [#allocation10], %s41
      %s43 = sshll.u32 [#allocation9], 4
      %s44 = int_to_ptr.vmem [resolvable:$true] %s43
      %49 = dma.hbm_to_vmem [thread:$0]  %s4, 8192, %s44, [#allocation10], 128, 128, 8
    $region13: #{tpu_custom_call.1} parent=1 // pred_fallthru
      _
    // Predicated region
    $region14: #{tpu_custom_call.1} parent=1 // pred_check
      _
    $region15: #{tpu_custom_call.1} parent=1 // pred_check_branch
      %51 = sbr.rel (0) target = $region17
    $region16: #{tpu_custom_call.1} parent=1 // pred_region
      _
    $region17: #{tpu_custom_call.1} parent=1 // pred_fallthru
      _
    // Predicated region
    $region18: #{tpu_custom_call.1} parent=1 // pred_check
      _
    $region19: #{tpu_custom_call.1} parent=1 // pred_check_branch
      %53 = sbr.rel (0) target = $region21
    $region20: #{tpu_custom_call.1} parent=1 // pred_region
      %54 = dma.done [#allocation7], 4096
    $region21: #{tpu_custom_call.1} parent=1 // pred_fallthru
      _
    // Predicated region
    $region22: #{tpu_custom_call.1} parent=1 // pred_check
      _
    $region23: #{tpu_custom_call.1} parent=1 // pred_check_branch
      %56 = sbr.rel (0) target = $region25
    $region24: #{tpu_custom_call.1} parent=1 // pred_region
      %57 = dma.done [#allocation10], 8192
    $region25: #{tpu_custom_call.1} parent=1 // pred_fallthru
      _
    %s58 = smul.u32 0, 4
    %s59 = smul.u32 %s58, 128
    %s60 = sld [smem:[#allocation5 + %s59]]
    %s61 = sadd.s32 %s59, 1
    %s62 = sld [smem:[#allocation5 + %s61]]
    %s63 = sadd.s32 %s59, 2
    %s64 = sld [smem:[#allocation5 + %s63]]
    %v65 = vld [vmem:[#allocation6] sm:$0xff]
    %s66 = sld [smem:[#allocation4 + %s59]]
    %s67 = smul.f32 %s66, %s60
    %v68 = vstv %s67
    %v69 = vmul.f32 %v68, %v65
    %v70 = vadd.f32 %v69, 0.0
    %s71 = sld [smem:[#allocation4 + %s61]]
    %s72 = smul.f32 %s71, %s62
    %v73 = vstv %s72
    %v74 = vmul.f32 %v73, %v65
    %v75 = vadd.f32 %v74, 0.0
    %s76 = sld [smem:[#allocation4 + %s63]]
    %s77 = smul.f32 %s76, %s64
    %v78 = vstv %s77
    %v79 = vmul.f32 %v78, %v65
    %v80 = vadd.f32 %v79, 0.0
    %s81 = sadd.s32 %s59, 3
    %s82 = sld [smem:[#allocation4 + %s81]]
    %s83 = smul.f32 %s82, %s64
    %v84 = vstv %s83
    %v85 = vmul.f32 %v84, %v65
    %v86 = vadd.f32 %v85, 0.0
    %s87 = scalar_lea.vmem [#allocation6], 8
    %v88 = vld [vmem:[%s87] sm:$0xff]
    %s89 = sadd.s32 %s59, 4
    %s90 = sld [smem:[#allocation4 + %s89]]
    %s91 = smul.f32 %s90, %s60
    %v92 = vstv %s91
    %v93 = vmul.f32 %v92, %v88
    %v94 = vadd.f32 %v70, %v93
    %s95 = sadd.s32 %s59, 5
    %s96 = sld [smem:[#allocation4 + %s95]]
    %s97 = smul.f32 %s96, %s62
    %v98 = vstv %s97
    %v99 = vmul.f32 %v98, %v88
    %v100 = vadd.f32 %v75, %v99
    %s101 = sadd.s32 %s59, 6
    %s102 = sld [smem:[#allocation4 + %s101]]
    %s103 = smul.f32 %s102, %s64
    %v104 = vstv %s103
    %v105 = vmul.f32 %v104, %v88
    %v106 = vadd.f32 %v80, %v105
    %s107 = sadd.s32 %s59, 7
    %s108 = sld [smem:[#allocation4 + %s107]]
    %s109 = smul.f32 %s108, %s64
    %v110 = vstv %s109
    %v111 = vmul.f32 %v110, %v88
    %v112 = vadd.f32 %v86, %v111
    %s113 = scalar_lea.vmem [#allocation6], 16
    %v114 = vld [vmem:[%s113] sm:$0xff]
    %s115 = sadd.s32 %s59, 8
    %s116 = sld [smem:[#allocation4 + %s115]]
    %s117 = smul.f32 %s116, %s60
    %v118 = vstv %s117
    %v119 = vmul.f32 %v118, %v114
    %v120 = vadd.f32 %v94, %v119
    %s121 = sadd.s32 %s59, 9
    %s122 = sld [smem:[#allocation4 + %s121]]
    %s123 = smul.f32 %s122, %s62
    %v124 = vstv %s123
    %v125 = vmul.f32 %v124, %v114
    %v126 = vadd.f32 %v100, %v125
    %s127 = sadd.s32 %s59, 10
    %s128 = sld [smem:[#allocation4 + %s127]]
    %s129 = smul.f32 %s128, %s64
    %v130 = vstv %s129
    %v131 = vmul.f32 %v130, %v114
    %v132 = vadd.f32 %v106, %v131
    %s133 = sadd.s32 %s59, 11
    %s134 = sld [smem:[#allocation4 + %s133]]
    %s135 = smul.f32 %s134, %s64
    %v136 = vstv %s135
    %v137 = vmul.f32 %v136, %v114
    %v138 = vadd.f32 %v112, %v137
    %s139 = scalar_lea.vmem [#allocation6], 24
    %v140 = vld [vmem:[%s139] sm:$0xff]
    %s141 = sadd.s32 %s59, 12
    %s142 = sld [smem:[#allocation4 + %s141]]
    %s143 = smul.f32 %s142, %s60
    %v144 = vstv %s143
    %v145 = vmul.f32 %v144, %v140
    %v146 = vadd.f32 %v120, %v145
    %s147 = sadd.s32 %s59, 13
    %s148 = sld [smem:[#allocation4 + %s147]]
    %s149 = smul.f32 %s148, %s62
    %v150 = vstv %s149
    %v151 = vmul.f32 %v150, %v140
    %v152 = vadd.f32 %v126, %v151
    %s153 = sadd.s32 %s59, 14
    %s154 = sld [smem:[#allocation4 + %s153]]
    %s155 = smul.f32 %s154, %s64
    %v156 = vstv %s155
    %v157 = vmul.f32 %v156, %v140
    %v158 = vadd.f32 %v132, %v157
    %s159 = sadd.s32 %s59, 15
    %s160 = sld [smem:[#allocation4 + %s159]]
    %s161 = smul.f32 %s160, %s64
    %v162 = vstv %s161
    %v163 = vmul.f32 %v162, %v140
    %v164 = vadd.f32 %v138, %v163
    %s165 = scalar_lea.vmem [#allocation6], 32
    %v166 = vld [vmem:[%s165] sm:$0xff]
    %s167 = sadd.s32 %s59, 16
    %s168 = sld [smem:[#allocation4 + %s167]]
    %s169 = smul.f32 %s168, %s60
    %v170 = vstv %s169
    %v171 = vmul.f32 %v170, %v166
    %v172 = vadd.f32 %v146, %v171
    %s173 = sadd.s32 %s59, 17
    %s174 = sld [smem:[#allocation4 + %s173]]
    %s175 = smul.f32 %s174, %s62
    %v176 = vstv %s175
    %v177 = vmul.f32 %v176, %v166
    %v178 = vadd.f32 %v152, %v177
    %s179 = sadd.s32 %s59, 18
    %s180 = sld [smem:[#allocation4 + %s179]]
    %s181 = smul.f32 %s180, %s64
    %v182 = vstv %s181
    %v183 = vmul.f32 %v182, %v166
    %v184 = vadd.f32 %v158, %v183
    %s185 = sadd.s32 %s59, 19
    %s186 = sld [smem:[#allocation4 + %s185]]
    %s187 = smul.f32 %s186, %s64
    %v188 = vstv %s187
    %v189 = vmul.f32 %v188, %v166
    %v190 = vadd.f32 %v164, %v189
    %s191 = scalar_lea.vmem [#allocation6], 40
    %v192 = vld [vmem:[%s191] sm:$0xff]
    %s193 = sadd.s32 %s59, 20
    %s194 = sld [smem:[#allocation4 + %s193]]
    %s195 = smul.f32 %s194, %s60
    %v196 = vstv %s195
    %v197 = vmul.f32 %v196, %v192
    %v198 = vadd.f32 %v172, %v197
    %s199 = sadd.s32 %s59, 21
    %s200 = sld [smem:[#allocation4 + %s199]]
    %s201 = smul.f32 %s200, %s62
    %v202 = vstv %s201
    %v203 = vmul.f32 %v202, %v192
    %v204 = vadd.f32 %v178, %v203
    %s205 = sadd.s32 %s59, 22
    %s206 = sld [smem:[#allocation4 + %s205]]
    %s207 = smul.f32 %s206, %s64
    %v208 = vstv %s207
    %v209 = vmul.f32 %v208, %v192
    %v210 = vadd.f32 %v184, %v209
    %s211 = sadd.s32 %s59, 23
    %s212 = sld [smem:[#allocation4 + %s211]]
    %s213 = smul.f32 %s212, %s64
    %v214 = vstv %s213
    %v215 = vmul.f32 %v214, %v192
    %v216 = vadd.f32 %v190, %v215
    %s217 = scalar_lea.vmem [#allocation6], 48
    %v218 = vld [vmem:[%s217] sm:$0xff]
    %s219 = sadd.s32 %s59, 24
    %s220 = sld [smem:[#allocation4 + %s219]]
    %s221 = smul.f32 %s220, %s60
    %v222 = vstv %s221
    %v223 = vmul.f32 %v222, %v218
    %v224 = vadd.f32 %v198, %v223
    %s225 = sadd.s32 %s59, 25
    %s226 = sld [smem:[#allocation4 + %s225]]
    %s227 = smul.f32 %s226, %s62
    %v228 = vstv %s227
    %v229 = vmul.f32 %v228, %v218
    %v230 = vadd.f32 %v204, %v229
    %s231 = sadd.s32 %s59, 26
    %s232 = sld [smem:[#allocation4 + %s231]]
    %s233 = smul.f32 %s232, %s64
    %v234 = vstv %s233
    %v235 = vmul.f32 %v234, %v218
    %v236 = vadd.f32 %v210, %v235
    %s237 = sadd.s32 %s59, 27
    %s238 = sld [smem:[#allocation4 + %s237]]
    %s239 = smul.f32 %s238, %s64
    %v240 = vstv %s239
    %v241 = vmul.f32 %v240, %v218
    %v242 = vadd.f32 %v216, %v241
    %s243 = scalar_lea.vmem [#allocation6], 56
    %v244 = vld [vmem:[%s243] sm:$0xff]
    %s245 = sadd.s32 %s59, 28
    %s246 = sld [smem:[#allocation4 + %s245]]
    %s247 = smul.f32 %s246, %s60
    %v248 = vstv %s247
    %v249 = vmul.f32 %v248, %v244
    %v250 = vadd.f32 %v224, %v249
    %s251 = sadd.s32 %s59, 29
    %s252 = sld [smem:[#allocation4 + %s251]]
    %s253 = smul.f32 %s252, %s62
    %v254 = vstv %s253
    %v255 = vmul.f32 %v254, %v244
    %v256 = vadd.f32 %v230, %v255
    %s257 = sadd.s32 %s59, 30
    %s258 = sld [smem:[#allocation4 + %s257]]
    %s259 = smul.f32 %s258, %s64
    %v260 = vstv %s259
    %v261 = vmul.f32 %v260, %v244
    %v262 = vadd.f32 %v236, %v261
    %s263 = sadd.s32 %s59, 31
    %s264 = sld [smem:[#allocation4 + %s263]]
    %s265 = smul.f32 %s264, %s64
    %v266 = vstv %s265
    %v267 = vmul.f32 %v266, %v244
    %v268 = vadd.f32 %v242, %v267
    %269 = vst [vmem:[#allocation2] sm:$0xff] %v250
    %270 = vst [vmem:[#allocation2 + $0x8] sm:$0xff] %v256
    %271 = vst [vmem:[#allocation2 + $0x10] sm:$0xff] %v262
    %272 = vst [vmem:[#allocation2 + $0x18] sm:$0xff] %v268
    %s273 = sadd.s32 %s58, 1
    %s274 = smul.u32 %s273, 128
    %s275 = sld [smem:[#allocation5 + %s274]]
    %s276 = sadd.s32 %s274, 1
    %s277 = sld [smem:[#allocation5 + %s276]]
    %s278 = sadd.s32 %s274, 2
    %s279 = sld [smem:[#allocation5 + %s278]]
    %s280 = scalar_lea.vmem [#allocation6], 64
    %v281 = vld [vmem:[%s280] sm:$0xff]
    %s282 = sld [smem:[#allocation4 + %s274]]
    %s283 = smul.f32 %s282, %s275
    %v284 = vstv %s283
    %v285 = vmul.f32 %v284, %v281
    %v286 = vadd.f32 %v285, 0.0
    %s287 = sld [smem:[#allocation4 + %s276]]
    %s288 = smul.f32 %s287, %s277
    %v289 = vstv %s288
    %v290 = vmul.f32 %v289, %v281
    %v291 = vadd.f32 %v290, 0.0
    %s292 = sld [smem:[#allocation4 + %s278]]
    %s293 = smul.f32 %s292, %s279
    %v294 = vstv %s293
    %v295 = vmul.f32 %v294, %v281
    %v296 = vadd.f32 %v295, 0.0
    %s297 = sadd.s32 %s274, 3
    %s298 = sld [smem:[#allocation4 + %s297]]
    %s299 = smul.f32 %s298, %s279
    %v300 = vstv %s299
    %v301 = vmul.f32 %v300, %v281
    %v302 = vadd.f32 %v301, 0.0
    %s303 = scalar_lea.vmem [#allocation6], 72
    %v304 = vld [vmem:[%s303] sm:$0xff]
    %s305 = sadd.s32 %s274, 4
    %s306 = sld [smem:[#allocation4 + %s305]]
    %s307 = smul.f32 %s306, %s275
    %v308 = vstv %s307
    %v309 = vmul.f32 %v308, %v304
    %v310 = vadd.f32 %v286, %v309
    %s311 = sadd.s32 %s274, 5
    %s312 = sld [smem:[#allocation4 + %s311]]
    %s313 = smul.f32 %s312, %s277
    %v314 = vstv %s313
    %v315 = vmul.f32 %v314, %v304
    %v316 = vadd.f32 %v291, %v315
    %s317 = sadd.s32 %s274, 6
    %s318 = sld [smem:[#allocation4 + %s317]]
    %s319 = smul.f32 %s318, %s279
    %v320 = vstv %s319
    %v321 = vmul.f32 %v320, %v304
    %v322 = vadd.f32 %v296, %v321
    %s323 = sadd.s32 %s274, 7
    %s324 = sld [smem:[#allocation4 + %s323]]
    %s325 = smul.f32 %s324, %s279
    %v326 = vstv %s325
    %v327 = vmul.f32 %v326, %v304
    %v328 = vadd.f32 %v302, %v327
    %s329 = scalar_lea.vmem [#allocation6], 80
    %v330 = vld [vmem:[%s329] sm:$0xff]
    %s331 = sadd.s32 %s274, 8
    %s332 = sld [smem:[#allocation4 + %s331]]
    %s333 = smul.f32 %s332, %s275
    %v334 = vstv %s333
    %v335 = vmul.f32 %v334, %v330
    %v336 = vadd.f32 %v310, %v335
    %s337 = sadd.s32 %s274, 9
    %s338 = sld [smem:[#allocation4 + %s337]]
    %s339 = smul.f32 %s338, %s277
    %v340 = vstv %s339
    %v341 = vmul.f32 %v340, %v330
    %v342 = vadd.f32 %v316, %v341
    %s343 = sadd.s32 %s274, 10
    %s344 = sld [smem:[#allocation4 + %s343]]
    %s345 = smul.f32 %s344, %s279
    %v346 = vstv %s345
    %v347 = vmul.f32 %v346, %v330
    %v348 = vadd.f32 %v322, %v347
    %s349 = sadd.s32 %s274, 11
    %s350 = sld [smem:[#allocation4 + %s349]]
    %s351 = smul.f32 %s350, %s279
    %v352 = vstv %s351
    %v353 = vmul.f32 %v352, %v330
    %v354 = vadd.f32 %v328, %v353
    %s355 = scalar_lea.vmem [#allocation6], 88
    %v356 = vld [vmem:[%s355] sm:$0xff]
    %s357 = sadd.s32 %s274, 12
    %s358 = sld [smem:[#allocation4 + %s357]]
    %s359 = smul.f32 %s358, %s275
    %v360 = vstv %s359
    %v361 = vmul.f32 %v360, %v356
    %v362 = vadd.f32 %v336, %v361
    %s363 = sadd.s32 %s274, 13
    %s364 = sld [smem:[#allocation4 + %s363]]
    %s365 = smul.f32 %s364, %s277
    %v366 = vstv %s365
    %v367 = vmul.f32 %v366, %v356
    %v368 = vadd.f32 %v342, %v367
    %s369 = sadd.s32 %s274, 14
    %s370 = sld [smem:[#allocation4 + %s369]]
    %s371 = smul.f32 %s370, %s279
    %v372 = vstv %s371
    %v373 = vmul.f32 %v372, %v356
    %v374 = vadd.f32 %v348, %v373
    %s375 = sadd.s32 %s274, 15
    %s376 = sld [smem:[#allocation4 + %s375]]
    %s377 = smul.f32 %s376, %s279
    %v378 = vstv %s377
    %v379 = vmul.f32 %v378, %v356
    %v380 = vadd.f32 %v354, %v379
    %s381 = scalar_lea.vmem [#allocation6], 96
    %v382 = vld [vmem:[%s381] sm:$0xff]
    %s383 = sadd.s32 %s274, 16
    %s384 = sld [smem:[#allocation4 + %s383]]
    %s385 = smul.f32 %s384, %s275
    %v386 = vstv %s385
    %v387 = vmul.f32 %v386, %v382
    %v388 = vadd.f32 %v362, %v387
    %s389 = sadd.s32 %s274, 17
    %s390 = sld [smem:[#allocation4 + %s389]]
    %s391 = smul.f32 %s390, %s277
    %v392 = vstv %s391
    %v393 = vmul.f32 %v392, %v382
    %v394 = vadd.f32 %v368, %v393
    %s395 = sadd.s32 %s274, 18
    %s396 = sld [smem:[#allocation4 + %s395]]
    %s397 = smul.f32 %s396, %s279
    %v398 = vstv %s397
    %v399 = vmul.f32 %v398, %v382
    %v400 = vadd.f32 %v374, %v399
    %s401 = sadd.s32 %s274, 19
    %s402 = sld [smem:[#allocation4 + %s401]]
    %s403 = smul.f32 %s402, %s279
    %v404 = vstv %s403
    %v405 = vmul.f32 %v404, %v382
    %v406 = vadd.f32 %v380, %v405
    %s407 = scalar_lea.vmem [#allocation6], 104
    %v408 = vld [vmem:[%s407] sm:$0xff]
    %s409 = sadd.s32 %s274, 20
    %s410 = sld [smem:[#allocation4 + %s409]]
    %s411 = smul.f32 %s410, %s275
    %v412 = vstv %s411
    %v413 = vmul.f32 %v412, %v408
    %v414 = vadd.f32 %v388, %v413
    %s415 = sadd.s32 %s274, 21
    %s416 = sld [smem:[#allocation4 + %s415]]
    %s417 = smul.f32 %s416, %s277
    %v418 = vstv %s417
    %v419 = vmul.f32 %v418, %v408
    %v420 = vadd.f32 %v394, %v419
    %s421 = sadd.s32 %s274, 22
    %s422 = sld [smem:[#allocation4 + %s421]]
    %s423 = smul.f32 %s422, %s279
    %v424 = vstv %s423
    %v425 = vmul.f32 %v424, %v408
    %v426 = vadd.f32 %v400, %v425
    %s427 = sadd.s32 %s274, 23
    %s428 = sld [smem:[#allocation4 + %s427]]
    %s429 = smul.f32 %s428, %s279
    %v430 = vstv %s429
    %v431 = vmul.f32 %v430, %v408
    %v432 = vadd.f32 %v406, %v431
    %s433 = scalar_lea.vmem [#allocation6], 112
    %v434 = vld [vmem:[%s433] sm:$0xff]
    %s435 = sadd.s32 %s274, 24
    %s436 = sld [smem:[#allocation4 + %s435]]
    %s437 = smul.f32 %s436, %s275
    %v438 = vstv %s437
    %v439 = vmul.f32 %v438, %v434
    %v440 = vadd.f32 %v414, %v439
    %s441 = sadd.s32 %s274, 25
    %s442 = sld [smem:[#allocation4 + %s441]]
    %s443 = smul.f32 %s442, %s277
    %v444 = vstv %s443
    %v445 = vmul.f32 %v444, %v434
    %v446 = vadd.f32 %v420, %v445
    %s447 = sadd.s32 %s274, 26
    %s448 = sld [smem:[#allocation4 + %s447]]
    %s449 = smul.f32 %s448, %s279
    %v450 = vstv %s449
    %v451 = vmul.f32 %v450, %v434
    %v452 = vadd.f32 %v426, %v451
    %s453 = sadd.s32 %s274, 27
    %s454 = sld [smem:[#allocation4 + %s453]]
    %s455 = smul.f32 %s454, %s279
    %v456 = vstv %s455
    %v457 = vmul.f32 %v456, %v434
    %v458 = vadd.f32 %v432, %v457
    %s459 = scalar_lea.vmem [#allocation6], 120
    %v460 = vld [vmem:[%s459] sm:$0xff]
    %s461 = sadd.s32 %s274, 28
    %s462 = sld [smem:[#allocation4 + %s461]]
    %s463 = smul.f32 %s462, %s275
    %v464 = vstv %s463
    %v465 = vmul.f32 %v464, %v460
    %v466 = vadd.f32 %v440, %v465
    %s467 = sadd.s32 %s274, 29
    %s468 = sld [smem:[#allocation4 + %s467]]
    %s469 = smul.f32 %s468, %s277
    %v470 = vstv %s469
    %v471 = vmul.f32 %v470, %v460
    %v472 = vadd.f32 %v446, %v471
    %s473 = sadd.s32 %s274, 30
    %s474 = sld [smem:[#allocation4 + %s473]]
    %s475 = smul.f32 %s474, %s279
    %v476 = vstv %s475
    %v477 = vmul.f32 %v476, %v460
    %v478 = vadd.f32 %v452, %v477
    %s479 = sadd.s32 %s274, 31
    %s480 = sld [smem:[#allocation4 + %s479]]
    %s481 = smul.f32 %s480, %s279
    %v482 = vstv %s481
    %v483 = vmul.f32 %v482, %v460
    %v484 = vadd.f32 %v458, %v483
    %485 = vst [vmem:[#allocation2 + $0x20] sm:$0xff] %v466
    %486 = vst [vmem:[#allocation2 + $0x28] sm:$0xff] %v472
    %487 = vst [vmem:[#allocation2 + $0x30] sm:$0xff] %v478
    %488 = vst [vmem:[#allocation2 + $0x38] sm:$0xff] %v484
    %s489 = sadd.s32 %s58, 2
    %s490 = smul.u32 %s489, 128
    %s491 = sld [smem:[#allocation5 + %s490]]
    %s492 = sadd.s32 %s490, 1
    %s493 = sld [smem:[#allocation5 + %s492]]
    %s494 = sadd.s32 %s490, 2
    %s495 = sld [smem:[#allocation5 + %s494]]
    %s496 = scalar_lea.vmem [#allocation6], 128
    %v497 = vld [vmem:[%s496] sm:$0xff]
    %s498 = sld [smem:[#allocation4 + %s490]]
    %s499 = smul.f32 %s498, %s491
    %v500 = vstv %s499
    %v501 = vmul.f32 %v500, %v497
    %v502 = vadd.f32 %v501, 0.0
    %s503 = sld [smem:[#allocation4 + %s492]]
    %s504 = smul.f32 %s503, %s493
    %v505 = vstv %s504
    %v506 = vmul.f32 %v505, %v497
    %v507 = vadd.f32 %v506, 0.0
    %s508 = sld [smem:[#allocation4 + %s494]]
    %s509 = smul.f32 %s508, %s495
    %v510 = vstv %s509
    %v511 = vmul.f32 %v510, %v497
    %v512 = vadd.f32 %v511, 0.0
    %s513 = sadd.s32 %s490, 3
    %s514 = sld [smem:[#allocation4 + %s513]]
    %s515 = smul.f32 %s514, %s495
    %v516 = vstv %s515
    %v517 = vmul.f32 %v516, %v497
    %v518 = vadd.f32 %v517, 0.0
    %s519 = scalar_lea.vmem [#allocation6], 136
    %v520 = vld [vmem:[%s519] sm:$0xff]
    %s521 = sadd.s32 %s490, 4
    %s522 = sld [smem:[#allocation4 + %s521]]
    %s523 = smul.f32 %s522, %s491
    %v524 = vstv %s523
    %v525 = vmul.f32 %v524, %v520
    %v526 = vadd.f32 %v502, %v525
    %s527 = sadd.s32 %s490, 5
    %s528 = sld [smem:[#allocation4 + %s527]]
    %s529 = smul.f32 %s528, %s493
    %v530 = vstv %s529
    %v531 = vmul.f32 %v530, %v520
    %v532 = vadd.f32 %v507, %v531
    %s533 = sadd.s32 %s490, 6
    %s534 = sld [smem:[#allocation4 + %s533]]
    %s535 = smul.f32 %s534, %s495
    %v536 = vstv %s535
    %v537 = vmul.f32 %v536, %v520
    %v538 = vadd.f32 %v512, %v537
    %s539 = sadd.s32 %s490, 7
    %s540 = sld [smem:[#allocation4 + %s539]]
    %s541 = smul.f32 %s540, %s495
    %v542 = vstv %s541
    %v543 = vmul.f32 %v542, %v520
    %v544 = vadd.f32 %v518, %v543
    %s545 = scalar_lea.vmem [#allocation6], 144
    %v546 = vld [vmem:[%s545] sm:$0xff]
    %s547 = sadd.s32 %s490, 8
    %s548 = sld [smem:[#allocation4 + %s547]]
    %s549 = smul.f32 %s548, %s491
    %v550 = vstv %s549
    %v551 = vmul.f32 %v550, %v546
    %v552 = vadd.f32 %v526, %v551
    %s553 = sadd.s32 %s490, 9
    %s554 = sld [smem:[#allocation4 + %s553]]
    %s555 = smul.f32 %s554, %s493
    %v556 = vstv %s555
    %v557 = vmul.f32 %v556, %v546
    %v558 = vadd.f32 %v532, %v557
    %s559 = sadd.s32 %s490, 10
    %s560 = sld [smem:[#allocation4 + %s559]]
    %s561 = smul.f32 %s560, %s495
    %v562 = vstv %s561
    %v563 = vmul.f32 %v562, %v546
    %v564 = vadd.f32 %v538, %v563
    %s565 = sadd.s32 %s490, 11
    %s566 = sld [smem:[#allocation4 + %s565]]
    %s567 = smul.f32 %s566, %s495
    %v568 = vstv %s567
    %v569 = vmul.f32 %v568, %v546
    %v570 = vadd.f32 %v544, %v569
    %s571 = scalar_lea.vmem [#allocation6], 152
    %v572 = vld [vmem:[%s571] sm:$0xff]
    %s573 = sadd.s32 %s490, 12
    %s574 = sld [smem:[#allocation4 + %s573]]
    %s575 = smul.f32 %s574, %s491
    %v576 = vstv %s575
    %v577 = vmul.f32 %v576, %v572
    %v578 = vadd.f32 %v552, %v577
    %s579 = sadd.s32 %s490, 13
    %s580 = sld [smem:[#allocation4 + %s579]]
    %s581 = smul.f32 %s580, %s493
    %v582 = vstv %s581
    %v583 = vmul.f32 %v582, %v572
    %v584 = vadd.f32 %v558, %v583
    %s585 = sadd.s32 %s490, 14
    %s586 = sld [smem:[#allocation4 + %s585]]
    %s587 = smul.f32 %s586, %s495
    %v588 = vstv %s587
    %v589 = vmul.f32 %v588, %v572
    %v590 = vadd.f32 %v564, %v589
    %s591 = sadd.s32 %s490, 15
    %s592 = sld [smem:[#allocation4 + %s591]]
    %s593 = smul.f32 %s592, %s495
    %v594 = vstv %s593
    %v595 = vmul.f32 %v594, %v572
    %v596 = vadd.f32 %v570, %v595
    %s597 = scalar_lea.vmem [#allocation6], 160
    %v598 = vld [vmem:[%s597] sm:$0xff]
    %s599 = sadd.s32 %s490, 16
    %s600 = sld [smem:[#allocation4 + %s599]]
    %s601 = smul.f32 %s600, %s491
    %v602 = vstv %s601
    %v603 = vmul.f32 %v602, %v598
    %v604 = vadd.f32 %v578, %v603
    %s605 = sadd.s32 %s490, 17
    %s606 = sld [smem:[#allocation4 + %s605]]
    %s607 = smul.f32 %s606, %s493
    %v608 = vstv %s607
    %v609 = vmul.f32 %v608, %v598
    %v610 = vadd.f32 %v584, %v609
    %s611 = sadd.s32 %s490, 18
    %s612 = sld [smem:[#allocation4 + %s611]]
    %s613 = smul.f32 %s612, %s495
    %v614 = vstv %s613
    %v615 = vmul.f32 %v614, %v598
    %v616 = vadd.f32 %v590, %v615
    %s617 = sadd.s32 %s490, 19
    %s618 = sld [smem:[#allocation4 + %s617]]
    %s619 = smul.f32 %s618, %s495
    %v620 = vstv %s619
    %v621 = vmul.f32 %v620, %v598
    %v622 = vadd.f32 %v596, %v621
    %s623 = scalar_lea.vmem [#allocation6], 168
    %v624 = vld [vmem:[%s623] sm:$0xff]
    %s625 = sadd.s32 %s490, 20
    %s626 = sld [smem:[#allocation4 + %s625]]
    %s627 = smul.f32 %s626, %s491
    %v628 = vstv %s627
    %v629 = vmul.f32 %v628, %v624
    %v630 = vadd.f32 %v604, %v629
    %s631 = sadd.s32 %s490, 21
    %s632 = sld [smem:[#allocation4 + %s631]]
    %s633 = smul.f32 %s632, %s493
    %v634 = vstv %s633
    %v635 = vmul.f32 %v634, %v624
    %v636 = vadd.f32 %v610, %v635
    %s637 = sadd.s32 %s490, 22
    %s638 = sld [smem:[#allocation4 + %s637]]
    %s639 = smul.f32 %s638, %s495
    %v640 = vstv %s639
    %v641 = vmul.f32 %v640, %v624
    %v642 = vadd.f32 %v616, %v641
    %s643 = sadd.s32 %s490, 23
    %s644 = sld [smem:[#allocation4 + %s643]]
    %s645 = smul.f32 %s644, %s495
    %v646 = vstv %s645
    %v647 = vmul.f32 %v646, %v624
    %v648 = vadd.f32 %v622, %v647
    %s649 = scalar_lea.vmem [#allocation6], 176
    %v650 = vld [vmem:[%s649] sm:$0xff]
    %s651 = sadd.s32 %s490, 24
    %s652 = sld [smem:[#allocation4 + %s651]]
    %s653 = smul.f32 %s652, %s491
    %v654 = vstv %s653
    %v655 = vmul.f32 %v654, %v650
    %v656 = vadd.f32 %v630, %v655
    %s657 = sadd.s32 %s490, 25
    %s658 = sld [smem:[#allocation4 + %s657]]
    %s659 = smul.f32 %s658, %s493
    %v660 = vstv %s659
    %v661 = vmul.f32 %v660, %v650
    %v662 = vadd.f32 %v636, %v661
    %s663 = sadd.s32 %s490, 26
    %s664 = sld [smem:[#allocation4 + %s663]]
    %s665 = smul.f32 %s664, %s495
    %v666 = vstv %s665
    %v667 = vmul.f32 %v666, %v650
    %v668 = vadd.f32 %v642, %v667
    %s669 = sadd.s32 %s490, 27
    %s670 = sld [smem:[#allocation4 + %s669]]
    %s671 = smul.f32 %s670, %s495
    %v672 = vstv %s671
    %v673 = vmul.f32 %v672, %v650
    %v674 = vadd.f32 %v648, %v673
    %s675 = scalar_lea.vmem [#allocation6], 184
    %v676 = vld [vmem:[%s675] sm:$0xff]
    %s677 = sadd.s32 %s490, 28
    %s678 = sld [smem:[#allocation4 + %s677]]
    %s679 = smul.f32 %s678, %s491
    %v680 = vstv %s679
    %v681 = vmul.f32 %v680, %v676
    %v682 = vadd.f32 %v656, %v681
    %s683 = sadd.s32 %s490, 29
    %s684 = sld [smem:[#allocation4 + %s683]]
    %s685 = smul.f32 %s684, %s493
    %v686 = vstv %s685
    %v687 = vmul.f32 %v686, %v676
    %v688 = vadd.f32 %v662, %v687
    %s689 = sadd.s32 %s490, 30
    %s690 = sld [smem:[#allocation4 + %s689]]
    %s691 = smul.f32 %s690, %s495
    %v692 = vstv %s691
    %v693 = vmul.f32 %v692, %v676
    %v694 = vadd.f32 %v668, %v693
    %s695 = sadd.s32 %s490, 31
    %s696 = sld [smem:[#allocation4 + %s695]]
    %s697 = smul.f32 %s696, %s495
    %v698 = vstv %s697
    %v699 = vmul.f32 %v698, %v676
    %v700 = vadd.f32 %v674, %v699
    %701 = vst [vmem:[#allocation2 + $0x40] sm:$0xff] %v682
    %702 = vst [vmem:[#allocation2 + $0x48] sm:$0xff] %v688
    %703 = vst [vmem:[#allocation2 + $0x50] sm:$0xff] %v694
    %704 = vst [vmem:[#allocation2 + $0x58] sm:$0xff] %v700
    %s705 = sadd.s32 %s58, 3
    %s706 = smul.u32 %s705, 128
    %s707 = sld [smem:[#allocation5 + %s706]]
    %s708 = sadd.s32 %s706, 1
    %s709 = sld [smem:[#allocation5 + %s708]]
    %s710 = sadd.s32 %s706, 2
    %s711 = sld [smem:[#allocation5 + %s710]]
    %s712 = scalar_lea.vmem [#allocation6], 192
    %v713 = vld [vmem:[%s712] sm:$0xff]
    %s714 = sld [smem:[#allocation4 + %s706]]
    %s715 = smul.f32 %s714, %s707
    %v716 = vstv %s715
    %v717 = vmul.f32 %v716, %v713
    %v718 = vadd.f32 %v717, 0.0
    %s719 = sld [smem:[#allocation4 + %s708]]
    %s720 = smul.f32 %s719, %s709
    %v721 = vstv %s720
    %v722 = vmul.f32 %v721, %v713
    %v723 = vadd.f32 %v722, 0.0
    %s724 = sld [smem:[#allocation4 + %s710]]
    %s725 = smul.f32 %s724, %s711
    %v726 = vstv %s725
    %v727 = vmul.f32 %v726, %v713
    %v728 = vadd.f32 %v727, 0.0
    %s729 = sadd.s32 %s706, 3
    %s730 = sld [smem:[#allocation4 + %s729]]
    %s731 = smul.f32 %s730, %s711
    %v732 = vstv %s731
    %v733 = vmul.f32 %v732, %v713
    %v734 = vadd.f32 %v733, 0.0
    %s735 = scalar_lea.vmem [#allocation6], 200
    %v736 = vld [vmem:[%s735] sm:$0xff]
    %s737 = sadd.s32 %s706, 4
    %s738 = sld [smem:[#allocation4 + %s737]]
    %s739 = smul.f32 %s738, %s707
    %v740 = vstv %s739
    %v741 = vmul.f32 %v740, %v736
    %v742 = vadd.f32 %v718, %v741
    %s743 = sadd.s32 %s706, 5
    %s744 = sld [smem:[#allocation4 + %s743]]
    %s745 = smul.f32 %s744, %s709
    %v746 = vstv %s745
    %v747 = vmul.f32 %v746, %v736
    %v748 = vadd.f32 %v723, %v747
    %s749 = sadd.s32 %s706, 6
    %s750 = sld [smem:[#allocation4 + %s749]]
    %s751 = smul.f32 %s750, %s711
    %v752 = vstv %s751
    %v753 = vmul.f32 %v752, %v736
    %v754 = vadd.f32 %v728, %v753
    %s755 = sadd.s32 %s706, 7
    %s756 = sld [smem:[#allocation4 + %s755]]
    %s757 = smul.f32 %s756, %s711
    %v758 = vstv %s757
    %v759 = vmul.f32 %v758, %v736
    %v760 = vadd.f32 %v734, %v759
    %s761 = scalar_lea.vmem [#allocation6], 208
    %v762 = vld [vmem:[%s761] sm:$0xff]
    %s763 = sadd.s32 %s706, 8
    %s764 = sld [smem:[#allocation4 + %s763]]
    %s765 = smul.f32 %s764, %s707
    %v766 = vstv %s765
    %v767 = vmul.f32 %v766, %v762
    %v768 = vadd.f32 %v742, %v767
    %s769 = sadd.s32 %s706, 9
    %s770 = sld [smem:[#allocation4 + %s769]]
    %s771 = smul.f32 %s770, %s709
    %v772 = vstv %s771
    %v773 = vmul.f32 %v772, %v762
    %v774 = vadd.f32 %v748, %v773
    %s775 = sadd.s32 %s706, 10
    %s776 = sld [smem:[#allocation4 + %s775]]
    %s777 = smul.f32 %s776, %s711
    %v778 = vstv %s777
    %v779 = vmul.f32 %v778, %v762
    %v780 = vadd.f32 %v754, %v779
    %s781 = sadd.s32 %s706, 11
    %s782 = sld [smem:[#allocation4 + %s781]]
    %s783 = smul.f32 %s782, %s711
    %v784 = vstv %s783
    %v785 = vmul.f32 %v784, %v762
    %v786 = vadd.f32 %v760, %v785
    %s787 = scalar_lea.vmem [#allocation6], 216
    %v788 = vld [vmem:[%s787] sm:$0xff]
    %s789 = sadd.s32 %s706, 12
    %s790 = sld [smem:[#allocation4 + %s789]]
    %s791 = smul.f32 %s790, %s707
    %v792 = vstv %s791
    %v793 = vmul.f32 %v792, %v788
    %v794 = vadd.f32 %v768, %v793
    %s795 = sadd.s32 %s706, 13
    %s796 = sld [smem:[#allocation4 + %s795]]
    %s797 = smul.f32 %s796, %s709
    %v798 = vstv %s797
    %v799 = vmul.f32 %v798, %v788
    %v800 = vadd.f32 %v774, %v799
    %s801 = sadd.s32 %s706, 14
    %s802 = sld [smem:[#allocation4 + %s801]]
    %s803 = smul.f32 %s802, %s711
    %v804 = vstv %s803
    %v805 = vmul.f32 %v804, %v788
    %v806 = vadd.f32 %v780, %v805
    %s807 = sadd.s32 %s706, 15
    %s808 = sld [smem:[#allocation4 + %s807]]
    %s809 = smul.f32 %s808, %s711
    %v810 = vstv %s809
    %v811 = vmul.f32 %v810, %v788
    %v812 = vadd.f32 %v786, %v811
    %s813 = scalar_lea.vmem [#allocation6], 224
    %v814 = vld [vmem:[%s813] sm:$0xff]
    %s815 = sadd.s32 %s706, 16
    %s816 = sld [smem:[#allocation4 + %s815]]
    %s817 = smul.f32 %s816, %s707
    %v818 = vstv %s817
    %v819 = vmul.f32 %v818, %v814
    %v820 = vadd.f32 %v794, %v819
    %s821 = sadd.s32 %s706, 17
    %s822 = sld [smem:[#allocation4 + %s821]]
    %s823 = smul.f32 %s822, %s709
    %v824 = vstv %s823
    %v825 = vmul.f32 %v824, %v814
    %v826 = vadd.f32 %v800, %v825
    %s827 = sadd.s32 %s706, 18
    %s828 = sld [smem:[#allocation4 + %s827]]
    %s829 = smul.f32 %s828, %s711
    %v830 = vstv %s829
    %v831 = vmul.f32 %v830, %v814
    %v832 = vadd.f32 %v806, %v831
    %s833 = sadd.s32 %s706, 19
    %s834 = sld [smem:[#allocation4 + %s833]]
    %s835 = smul.f32 %s834, %s711
    %v836 = vstv %s835
    %v837 = vmul.f32 %v836, %v814
    %v838 = vadd.f32 %v812, %v837
    %s839 = scalar_lea.vmem [#allocation6], 232
    %v840 = vld [vmem:[%s839] sm:$0xff]
    %s841 = sadd.s32 %s706, 20
    %s842 = sld [smem:[#allocation4 + %s841]]
    %s843 = smul.f32 %s842, %s707
    %v844 = vstv %s843
    %v845 = vmul.f32 %v844, %v840
    %v846 = vadd.f32 %v820, %v845
    %s847 = sadd.s32 %s706, 21
    %s848 = sld [smem:[#allocation4 + %s847]]
    %s849 = smul.f32 %s848, %s709
    %v850 = vstv %s849
    %v851 = vmul.f32 %v850, %v840
    %v852 = vadd.f32 %v826, %v851
    %s853 = sadd.s32 %s706, 22
    %s854 = sld [smem:[#allocation4 + %s853]]
    %s855 = smul.f32 %s854, %s711
    %v856 = vstv %s855
    %v857 = vmul.f32 %v856, %v840
    %v858 = vadd.f32 %v832, %v857
    %s859 = sadd.s32 %s706, 23
    %s860 = sld [smem:[#allocation4 + %s859]]
    %s861 = smul.f32 %s860, %s711
    %v862 = vstv %s861
    %v863 = vmul.f32 %v862, %v840
    %v864 = vadd.f32 %v838, %v863
    %s865 = scalar_lea.vmem [#allocation6], 240
    %v866 = vld [vmem:[%s865] sm:$0xff]
    %s867 = sadd.s32 %s706, 24
    %s868 = sld [smem:[#allocation4 + %s867]]
    %s869 = smul.f32 %s868, %s707
    %v870 = vstv %s869
    %v871 = vmul.f32 %v870, %v866
    %v872 = vadd.f32 %v846, %v871
    %s873 = sadd.s32 %s706, 25
    %s874 = sld [smem:[#allocation4 + %s873]]
    %s875 = smul.f32 %s874, %s709
    %v876 = vstv %s875
    %v877 = vmul.f32 %v876, %v866
    %v878 = vadd.f32 %v852, %v877
    %s879 = sadd.s32 %s706, 26
    %s880 = sld [smem:[#allocation4 + %s879]]
    %s881 = smul.f32 %s880, %s711
    %v882 = vstv %s881
    %v883 = vmul.f32 %v882, %v866
    %v884 = vadd.f32 %v858, %v883
    %s885 = sadd.s32 %s706, 27
    %s886 = sld [smem:[#allocation4 + %s885]]
    %s887 = smul.f32 %s886, %s711
    %v888 = vstv %s887
    %v889 = vmul.f32 %v888, %v866
    %v890 = vadd.f32 %v864, %v889
    %s891 = scalar_lea.vmem [#allocation6], 248
    %v892 = vld [vmem:[%s891] sm:$0xff]
    %s893 = sadd.s32 %s706, 28
    %s894 = sld [smem:[#allocation4 + %s893]]
    %s895 = smul.f32 %s894, %s707
    %v896 = vstv %s895
    %v897 = vmul.f32 %v896, %v892
    %v898 = vadd.f32 %v872, %v897
    %s899 = sadd.s32 %s706, 29
    %s900 = sld [smem:[#allocation4 + %s899]]
    %s901 = smul.f32 %s900, %s709
    %v902 = vstv %s901
    %v903 = vmul.f32 %v902, %v892
    %v904 = vadd.f32 %v878, %v903
    %s905 = sadd.s32 %s706, 30
    %s906 = sld [smem:[#allocation4 + %s905]]
    %s907 = smul.f32 %s906, %s711
    %v908 = vstv %s907
    %v909 = vmul.f32 %v908, %v892
    %v910 = vadd.f32 %v884, %v909
    %s911 = sadd.s32 %s706, 31
    %s912 = sld [smem:[#allocation4 + %s911]]
    %s913 = smul.f32 %s912, %s711
    %v914 = vstv %s913
    %v915 = vmul.f32 %v914, %v892
    %v916 = vadd.f32 %v890, %v915
    %917 = vst [vmem:[#allocation2 + $0x60] sm:$0xff] %v898
    %918 = vst [vmem:[#allocation2 + $0x68] sm:$0xff] %v904
    %919 = vst [vmem:[#allocation2 + $0x70] sm:$0xff] %v910
    %920 = vst [vmem:[#allocation2 + $0x78] sm:$0xff] %v916
    %v921 = vld [vmem:[#allocation2] sm:$0xff]
    %v922 = vld [vmem:[#allocation2 + $0x8] sm:$0xff]
    %v923 = vld [vmem:[#allocation2 + $0x10] sm:$0xff]
    %v924 = vld [vmem:[#allocation2 + $0x18] sm:$0xff]
    %v925 = vld [vmem:[#allocation2 + $0x20] sm:$0xff]
    %v926 = vld [vmem:[#allocation2 + $0x28] sm:$0xff]
    %v927 = vld [vmem:[#allocation2 + $0x30] sm:$0xff]
    %v928 = vld [vmem:[#allocation2 + $0x38] sm:$0xff]
    %v929 = vld [vmem:[#allocation2 + $0x40] sm:$0xff]
    %v930 = vld [vmem:[#allocation2 + $0x48] sm:$0xff]
    %v931 = vld [vmem:[#allocation2 + $0x50] sm:$0xff]
    %v932 = vld [vmem:[#allocation2 + $0x58] sm:$0xff]
    %v933 = vld [vmem:[#allocation2 + $0x60] sm:$0xff]
    %v934 = vld [vmem:[#allocation2 + $0x68] sm:$0xff]
    %v935 = vld [vmem:[#allocation2 + $0x70] sm:$0xff]
    %v936 = vld [vmem:[#allocation2 + $0x78] sm:$0xff]
    %v937 = vld [vmem:[#allocation9] sm:$0xff]
    %v938 = vld [vmem:[#allocation9 + $0x8] sm:$0xff]
    %v939 = vld [vmem:[#allocation9 + $0x10] sm:$0xff]
    %v940 = vld [vmem:[#allocation9 + $0x18] sm:$0xff]
    %v941 = vld [vmem:[#allocation9 + $0x20] sm:$0xff]
    %v942 = vld [vmem:[#allocation9 + $0x28] sm:$0xff]
    %v943 = vld [vmem:[#allocation9 + $0x30] sm:$0xff]
    %v944 = vld [vmem:[#allocation9 + $0x38] sm:$0xff]
    %v945 = vld [vmem:[#allocation9 + $0x40] sm:$0xff]
    %v946 = vld [vmem:[#allocation9 + $0x48] sm:$0xff]
    %v947 = vld [vmem:[#allocation9 + $0x50] sm:$0xff]
    %v948 = vld [vmem:[#allocation9 + $0x58] sm:$0xff]
    %v949 = vld [vmem:[#allocation9 + $0x60] sm:$0xff]
    %v950 = vld [vmem:[#allocation9 + $0x68] sm:$0xff]
    %v951 = vld [vmem:[#allocation9 + $0x70] sm:$0xff]
    %v952 = vld [vmem:[#allocation9 + $0x78] sm:$0xff]
    %v953 = vld [vmem:[#allocation9 + $0x80] sm:$0xff]
    %v954 = vld [vmem:[#allocation9 + $0x88] sm:$0xff]
    %v955 = vld [vmem:[#allocation9 + $0x90] sm:$0xff]
    %v956 = vld [vmem:[#allocation9 + $0x98] sm:$0xff]
    %v957 = vld [vmem:[#allocation9 + $0xa0] sm:$0xff]
    %v958 = vld [vmem:[#allocation9 + $0xa8] sm:$0xff]
    %v959 = vld [vmem:[#allocation9 + $0xb0] sm:$0xff]
    %v960 = vld [vmem:[#allocation9 + $0xb8] sm:$0xff]
    %v961 = vld [vmem:[#allocation9 + $0xc0] sm:$0xff]
    %v962 = vld [vmem:[#allocation9 + $0xc8] sm:$0xff]
    %v963 = vld [vmem:[#allocation9 + $0xd0] sm:$0xff]
    %v964 = vld [vmem:[#allocation9 + $0xd8] sm:$0xff]
    %v965 = vld [vmem:[#allocation9 + $0xe0] sm:$0xff]
    %v966 = vld [vmem:[#allocation9 + $0xe8] sm:$0xff]
    %v967 = vld [vmem:[#allocation9 + $0xf0] sm:$0xff]
    %v968 = vld [vmem:[#allocation9 + $0xf8] sm:$0xff]
    %v969 = vld [vmem:[#allocation9 + $0x100] sm:$0xff]
    %v970 = vld [vmem:[#allocation9 + $0x108] sm:$0xff]
    %v971 = vld [vmem:[#allocation9 + $0x110] sm:$0xff]
    %v972 = vld [vmem:[#allocation9 + $0x118] sm:$0xff]
    %v973 = vld [vmem:[#allocation9 + $0x120] sm:$0xff]
    %v974 = vld [vmem:[#allocation9 + $0x128] sm:$0xff]
    %v975 = vld [vmem:[#allocation9 + $0x130] sm:$0xff]
    %v976 = vld [vmem:[#allocation9 + $0x138] sm:$0xff]
    %v977 = vld [vmem:[#allocation9 + $0x140] sm:$0xff]
    %v978 = vld [vmem:[#allocation9 + $0x148] sm:$0xff]
    %v979 = vld [vmem:[#allocation9 + $0x150] sm:$0xff]
    %v980 = vld [vmem:[#allocation9 + $0x158] sm:$0xff]
    %v981 = vld [vmem:[#allocation9 + $0x160] sm:$0xff]
    %v982 = vld [vmem:[#allocation9 + $0x168] sm:$0xff]
    %v983 = vld [vmem:[#allocation9 + $0x170] sm:$0xff]
    %v984 = vld [vmem:[#allocation9 + $0x178] sm:$0xff]
    %v985 = vld [vmem:[#allocation9 + $0x180] sm:$0xff]
    %v986 = vld [vmem:[#allocation9 + $0x188] sm:$0xff]
    %v987 = vld [vmem:[#allocation9 + $0x190] sm:$0xff]
    %v988 = vld [vmem:[#allocation9 + $0x198] sm:$0xff]
    %v989 = vld [vmem:[#allocation9 + $0x1a0] sm:$0xff]
    %v990 = vld [vmem:[#allocation9 + $0x1a8] sm:$0xff]
    %v991 = vld [vmem:[#allocation9 + $0x1b0] sm:$0xff]
    %v992 = vld [vmem:[#allocation9 + $0x1b8] sm:$0xff]
    %v993 = vld [vmem:[#allocation9 + $0x1c0] sm:$0xff]
    %v994 = vld [vmem:[#allocation9 + $0x1c8] sm:$0xff]
    %v995 = vld [vmem:[#allocation9 + $0x1d0] sm:$0xff]
    %v996 = vld [vmem:[#allocation9 + $0x1d8] sm:$0xff]
    %v997 = vld [vmem:[#allocation9 + $0x1e0] sm:$0xff]
    %v998 = vld [vmem:[#allocation9 + $0x1e8] sm:$0xff]
    %v999 = vld [vmem:[#allocation9 + $0x1f0] sm:$0xff]
    %v1000 = vld [vmem:[#allocation9 + $0x1f8] sm:$0xff]
    %1001 = vmatprep.subr.mxu0 0.0
    %1002 = vmatpush1.msra.mxu0 %v952
    %1003 = vmatprep.subr.mxu0 0.0
    %1004 = vmatpush1.msra.mxu0 %v951
    %1005 = vmatprep.subr.mxu0 0.0
    %1006 = vmatpush1.msra.mxu0 %v950
    %1007 = vmatprep.subr.mxu0 0.0
    %1008 = vmatpush1.msra.mxu0 %v949
    %1009 = vmatprep.subr.mxu0 0.0
    %1010 = vmatpush1.msra.mxu0 %v948
    %1011 = vmatprep.subr.mxu0 0.0
    %1012 = vmatpush1.msra.mxu0 %v947
    %1013 = vmatprep.subr.mxu0 0.0
    %1014 = vmatpush1.msra.mxu0 %v946
    %1015 = vmatprep.subr.mxu0 0.0
    %1016 = vmatpush1.msra.mxu0 %v945
    %1017 = vmatprep.subr.mxu0 0.0
    %1018 = vmatpush1.msra.mxu0 %v944
    %1019 = vmatprep.subr.mxu0 0.0
    %1020 = vmatpush1.msra.mxu0 %v943
    %1021 = vmatprep.subr.mxu0 0.0
    %1022 = vmatpush1.msra.mxu0 %v942
    %1023 = vmatprep.subr.mxu0 0.0
    %1024 = vmatpush1.msra.mxu0 %v941
    %1025 = vmatprep.subr.mxu0 0.0
    %1026 = vmatpush1.msra.mxu0 %v940
    %1027 = vmatprep.subr.mxu0 0.0
    %1028 = vmatpush1.msra.mxu0 %v939
    %1029 = vmatprep.subr.mxu0 0.0
    %1030 = vmatpush1.msra.mxu0 %v938
    %1031 = vmatprep.subr.mxu0 0.0
    %1032 = vmatpush1.msra.mxu0 %v937
    %1033 = vmatprep.subr.mxu0 0.0
    %1034 = vmatpush2.msra.mxu0 %v968
    %1035 = vmatprep.subr.mxu0 0.0
    %1036 = vmatpush2.msra.mxu0 %v967
    %1037 = vmatprep.subr.mxu0 0.0
    %1038 = vmatpush2.msra.mxu0 %v966
    %1039 = vmatprep.subr.mxu0 0.0
    %1040 = vmatpush2.msra.mxu0 %v965
    %1041 = vmatprep.subr.mxu0 0.0
    %1042 = vmatpush2.msra.mxu0 %v964
    %1043 = vmatprep.subr.mxu0 0.0
    %1044 = vmatpush2.msra.mxu0 %v963
    %1045 = vmatprep.subr.mxu0 0.0
    %1046 = vmatpush2.msra.mxu0 %v962
    %1047 = vmatprep.subr.mxu0 0.0
    %1048 = vmatpush2.msra.mxu0 %v961
    %1049 = vmatprep.subr.mxu0 0.0
    %1050 = vmatpush2.msra.mxu0 %v960
    %1051 = vmatprep.subr.mxu0 0.0
    %1052 = vmatpush2.msra.mxu0 %v959
    %1053 = vmatprep.subr.mxu0 0.0
    %1054 = vmatpush2.msra.mxu0 %v958
    %1055 = vmatprep.subr.mxu0 0.0
    %1056 = vmatpush2.msra.mxu0 %v957
    %1057 = vmatprep.subr.mxu0 0.0
    %1058 = vmatpush2.msra.mxu0 %v956
    %1059 = vmatprep.subr.mxu0 0.0
    %1060 = vmatpush2.msra.mxu0 %v955
    %1061 = vmatprep.subr.mxu0 0.0
    %1062 = vmatpush2.msra.mxu0 %v954
    %1063 = vmatprep.subr.mxu0 0.0
    %1064 = vmatpush2.msra.mxu0 %v953
    %1065 = vmatprep.mubr.f32.mxu0 %v922
    %1066 = vmatmul.mubr.f32.gmra.mxu0 %v921
    %v1067 = vpop.f32.mrf.mxu0
    %v1068 = vadd.f32 0.0, %v1067
    %v1069 = vpop.f32.mrf.mxu0
    %1070 = vmatprep.mubr.f32.mxu0 %v926
    %1071 = vmatmul.mubr.f32.gmra.mxu0 %v925
    %v1072 = vpop.f32.mrf.mxu0
    %v1073 = vadd.f32 0.0, %v1072
    %v1074 = vpop.f32.mrf.mxu0
    %1075 = vmatprep.mubr.f32.mxu0 %v930
    %1076 = vmatmul.mubr.f32.gmra.mxu0 %v929
    %v1077 = vpop.f32.mrf.mxu0
    %v1078 = vadd.f32 0.0, %v1077
    %v1079 = vpop.f32.mrf.mxu0
    %1080 = vmatprep.mubr.f32.mxu0 %v934
    %1081 = vmatmul.mubr.f32.gmra.mxu0 %v933
    %v1082 = vpop.f32.mrf.mxu0
    %v1083 = vadd.f32 0.0, %v1082
    %v1084 = vpop.f32.mrf.mxu0
    %1085 = vdwg.mxu0
    %1086 = vmatprep.subr.mxu0 0.0
    %1087 = vmatpush1.msra.mxu0 %v984
    %1088 = vmatprep.subr.mxu0 0.0
    %1089 = vmatpush1.msra.mxu0 %v983
    %1090 = vmatprep.subr.mxu0 0.0
    %1091 = vmatpush1.msra.mxu0 %v982
    %1092 = vmatprep.subr.mxu0 0.0
    %1093 = vmatpush1.msra.mxu0 %v981
    %1094 = vmatprep.subr.mxu0 0.0
    %1095 = vmatpush1.msra.mxu0 %v980
    %1096 = vmatprep.subr.mxu0 0.0
    %1097 = vmatpush1.msra.mxu0 %v979
    %1098 = vmatprep.subr.mxu0 0.0
    %1099 = vmatpush1.msra.mxu0 %v978
    %1100 = vmatprep.subr.mxu0 0.0
    %1101 = vmatpush1.msra.mxu0 %v977
    %1102 = vmatprep.subr.mxu0 0.0
    %1103 = vmatpush1.msra.mxu0 %v976
    %1104 = vmatprep.subr.mxu0 0.0
    %1105 = vmatpush1.msra.mxu0 %v975
    %1106 = vmatprep.subr.mxu0 0.0
    %1107 = vmatpush1.msra.mxu0 %v974
    %1108 = vmatprep.subr.mxu0 0.0
    %1109 = vmatpush1.msra.mxu0 %v973
    %1110 = vmatprep.subr.mxu0 0.0
    %1111 = vmatpush1.msra.mxu0 %v972
    %1112 = vmatprep.subr.mxu0 0.0
    %1113 = vmatpush1.msra.mxu0 %v971
    %1114 = vmatprep.subr.mxu0 0.0
    %1115 = vmatpush1.msra.mxu0 %v970
    %1116 = vmatprep.subr.mxu0 0.0
    %1117 = vmatpush1.msra.mxu0 %v969
    %1118 = vmatprep.subr.mxu0 0.0
    %1119 = vmatpush2.msra.mxu0 %v1000
    %1120 = vmatprep.subr.mxu0 0.0
    %1121 = vmatpush2.msra.mxu0 %v999
    %1122 = vmatprep.subr.mxu0 0.0
    %1123 = vmatpush2.msra.mxu0 %v998
    %1124 = vmatprep.subr.mxu0 0.0
    %1125 = vmatpush2.msra.mxu0 %v997
    %1126 = vmatprep.subr.mxu0 0.0
    %1127 = vmatpush2.msra.mxu0 %v996
    %1128 = vmatprep.subr.mxu0 0.0
    %1129 = vmatpush2.msra.mxu0 %v995
    %1130 = vmatprep.subr.mxu0 0.0
    %1131 = vmatpush2.msra.mxu0 %v994
    %1132 = vmatprep.subr.mxu0 0.0
    %1133 = vmatpush2.msra.mxu0 %v993
    %1134 = vmatprep.subr.mxu0 0.0
    %1135 = vmatpush2.msra.mxu0 %v992
    %1136 = vmatprep.subr.mxu0 0.0
    %1137 = vmatpush2.msra.mxu0 %v991
    %1138 = vmatprep.subr.mxu0 0.0
    %1139 = vmatpush2.msra.mxu0 %v990
    %1140 = vmatprep.subr.mxu0 0.0
    %1141 = vmatpush2.msra.mxu0 %v989
    %1142 = vmatprep.subr.mxu0 0.0
    %1143 = vmatpush2.msra.mxu0 %v988
    %1144 = vmatprep.subr.mxu0 0.0
    %1145 = vmatpush2.msra.mxu0 %v987
    %1146 = vmatprep.subr.mxu0 0.0
    %1147 = vmatpush2.msra.mxu0 %v986
    %1148 = vmatprep.subr.mxu0 0.0
    %1149 = vmatpush2.msra.mxu0 %v985
    %1150 = vmatprep.mubr.f32.mxu0 %v924
    %1151 = vmatmul.mubr.f32.gmra.mxu0 %v923
    %v1152 = vpop.f32.mrf.mxu0
    %v1153 = vadd.f32 %v1068, %v1152
    %v1154 = vpop.f32.mrf.mxu0
    %1155 = vmatprep.mubr.f32.mxu0 %v928
    %1156 = vmatmul.mubr.f32.gmra.mxu0 %v927
    %v1157 = vpop.f32.mrf.mxu0
    %v1158 = vadd.f32 %v1073, %v1157
    %v1159 = vpop.f32.mrf.mxu0
    %1160 = vmatprep.mubr.f32.mxu0 %v932
    %1161 = vmatmul.mubr.f32.gmra.mxu0 %v931
    %v1162 = vpop.f32.mrf.mxu0
    %v1163 = vadd.f32 %v1078, %v1162
    %v1164 = vpop.f32.mrf.mxu0
    %1165 = vmatprep.mubr.f32.mxu0 %v936
    %1166 = vmatmul.mubr.f32.gmra.mxu0 %v935
    %v1167 = vpop.f32.mrf.mxu0
    %v1168 = vadd.f32 %v1083, %v1167
    %v1169 = vpop.f32.mrf.mxu0
    %1170 = vdwg.mxu0
    %v1171 = vld [vmem:[%s5] sm:$0x1]
    %s1172 = sld [smem:[#allocation5 + %s63]]
    %v1173 = vld [vmem:[%s3] sm:$0xff]
    %v1174 = vstv %s1172
    %v1175 = vmul.f32 %v1174, %v1173
    %1177 = vset.pattern.permute.xlu0 0
    %1178 = vperm.xlu0 %1177, %v1175
    %v1179 = vpop.permute.xlu0 %1178
    %v1182 = vlaneseq
    %v1183 = vshrl.u32 %v1182, 7
    %v1184 = vsub.s32 0, %v1183
    %v1185 = vrot.slane %v1171, %v1184
    %v1187 = vmul.f32 %v1179, %v1185
    %v1188 = vadd.f32 %v1153, %v1187
    %1189 = vst [vmem:[#allocation11] sm:$0xff] %v1188
    %s1190 = sld [smem:[#allocation5 + %s278]]
    %s1191 = scalar_lea.vmem %s3, 8
    %v1192 = vld [vmem:[%s1191] sm:$0xff]
    %v1193 = vstv %s1190
    %v1194 = vmul.f32 %v1193, %v1192
    %1196 = vset.pattern.permute.xlu0 0
    %1197 = vperm.xlu0 %1196, %v1194
    %v1198 = vpop.permute.xlu0 %1197
    %v1200 = vmul.f32 %v1198, %v1185
    %v1201 = vadd.f32 %v1158, %v1200
    %s1202 = scalar_lea.vmem [#allocation11], 8
    %1203 = vst [vmem:[%s1202] sm:$0xff] %v1201
    %s1204 = sld [smem:[#allocation5 + %s494]]
    %s1205 = scalar_lea.vmem %s3, 16
    %v1206 = vld [vmem:[%s1205] sm:$0xff]
    %v1207 = vstv %s1204
    %v1208 = vmul.f32 %v1207, %v1206
    %1210 = vset.pattern.permute.xlu0 0
    %1211 = vperm.xlu0 %1210, %v1208
    %v1212 = vpop.permute.xlu0 %1211
    %v1214 = vmul.f32 %v1212, %v1185
    %v1215 = vadd.f32 %v1163, %v1214
    %s1216 = scalar_lea.vmem [#allocation11], 16
    %1217 = vst [vmem:[%s1216] sm:$0xff] %v1215
    %s1218 = sld [smem:[#allocation5 + %s710]]
    %s1219 = scalar_lea.vmem %s3, 24
    %v1220 = vld [vmem:[%s1219] sm:$0xff]
    %v1221 = vstv %s1218
    %v1222 = vmul.f32 %v1221, %v1220
    %1224 = vset.pattern.permute.xlu0 0
    %1225 = vperm.xlu0 %1224, %v1222
    %v1226 = vpop.permute.xlu0 %1225
    %v1228 = vmul.f32 %v1226, %v1185
    %v1229 = vadd.f32 %v1168, %v1228
    %s1230 = scalar_lea.vmem [#allocation11], 24
    %1231 = vst [vmem:[%s1230] sm:$0xff] %v1229
    // Predicated region
    $region26: #{tpu_custom_call.1} parent=1 // pred_check
      _
    $region27: #{tpu_custom_call.1} parent=1 // pred_check_branch
      %1233 = sbr.rel (0) target = $region29
    $region28: #{tpu_custom_call.1} parent=1 // pred_region
      %s1235 = ssub.s32 512, 512
      %1236 = vsyncadd [#allocation8], %s1235
      %s1237 = sshll.u32 [#allocation11], 4
      %s1238 = int_to_ptr.vmem [resolvable:$true] %s1237
      %1243 = dma.vmem_to_hbm [thread:$0]  %s1238, 512, %s6, [#allocation8], 128, 128, 8
    $region29: #{tpu_custom_call.1} parent=1 // pred_fallthru
      _
    // Predicated region
    $region30: #{tpu_custom_call.1} parent=1 // pred_check
      _
    $region31: #{tpu_custom_call.1} parent=1 // pred_check_branch
      %1245 = sbr.rel (0) target = $region33
    $region32: #{tpu_custom_call.1} parent=1 // pred_region
      %1246 = dma.done [#allocation8], 512
    $region33: #{tpu_custom_call.1} parent=1 // pred_fallthru
      _
    %1247 = vsyncpa [#allocation7], 1
    %1248 = vsyncpa [#allocation10], 1
    %1249 = vsyncpa [#allocation8], 1

</llo_original>
